<compile_context>
chip_gen: v6e
topology: v6e:2x2x1
jax: 0.10.0
libtpu: 0.0.40
codegen_flags: <defaults>
</compile_context>

<pallas_src>
import functools
import math

import jax
import jax.numpy as jnp
from jax import lax
from jax.experimental import pallas as pl
from jax.experimental.pallas import tpu as pltpu


def _cross_attention_kernel(dec_ref, enc_ref, wq_ref, bq_ref, wkv_ref, bkv_ref,
                            *rest, num_heads, head_dim, has_mask):
    """One (batch, q-tile) grid step of multi-head cross attention."""
    if has_mask:
        mask_ref, out_ref = rest
    else:
        (out_ref,) = rest

    d_model = num_heads * head_dim
    in_dtype = dec_ref.dtype

    dec = dec_ref[0]                                   # (tq, D), activation dtype
    enc = enc_ref[0]                                   # (Sk, D)

    # Q projection with pre-transposed weight (D_in, D_out); fold the
    # 1/sqrt(head_dim) scale into q once (one (tq, D) VPU multiply).
    scale = 1.0 / math.sqrt(head_dim)
    q = jnp.dot(dec, wq_ref[...], preferred_element_type=jnp.float32)
    q = ((q + bq_ref[0]) * scale).astype(in_dtype)     # (tq, D)

    # Fused K/V projection: one (Sk, D) x (D, 2D) MXU op, then lane-slice.
    kv = jnp.dot(enc, wkv_ref[...], preferred_element_type=jnp.float32)
    kv = (kv + bkv_ref[0]).astype(in_dtype)            # (Sk, 2D)
    k = kv[:, :d_model]
    v = kv[:, d_model:]

    if has_mask:
        mask = mask_ref[0].astype(jnp.float32)         # (tq, Sk) additive mask

    ctx_heads = []
    for h in range(num_heads):                         # static, small head count
        sl = slice(h * head_dim, (h + 1) * head_dim)
        qh = q[:, sl]                                  # (tq, Dh)
        kh = k[:, sl]                                  # (Sk, Dh)
        vh = v[:, sl]                                  # (Sk, Dh)

        # qh @ kh^T without materializing a transpose: contract last dims.
        scores = lax.dot_general(qh, kh, (((1,), (1,)), ((), ())),
                                 preferred_element_type=jnp.float32)  # (tq, Sk)
        if has_mask:
            scores = scores + mask
        scores = scores - jnp.max(scores, axis=-1, keepdims=True)
        e = jnp.exp(scores)
        inv_l = pl.reciprocal(jnp.sum(e, axis=-1, keepdims=True), approx=True)
        probs = (e * inv_l).astype(in_dtype)
        # TODO(synk): nn.Dropout on attention probs is identity in eval mode; not applied.
        ctx_heads.append(jnp.dot(probs, vh, preferred_element_type=jnp.float32))

    # Single lane-dense (tq, D) store instead of num_heads masked partial stores.
    out_ref[0] = jnp.concatenate(ctx_heads, axis=-1).astype(out_ref.dtype)


def cross_attention(decoder_hidden_states, encoder_outputs, params,
                    attention_mask=None, *, num_heads, block_q=None,
                    vmem_limit_bytes=48 * 1024 * 1024):
    dec, enc = decoder_hidden_states, encoder_outputs
    B, Sq, D = dec.shape
    _, Sk, _ = enc.shape
    assert D % num_heads == 0
    head_dim = D // num_heads
    wq, bq, wk, bk, wv, bv = params

    # One-time XLA-side layout prep: pre-transpose weights to (D_in, D_out) and
    # fuse K/V weights/biases so the kernel never runs an XLU transpose.
    wq_t = wq.T                                            # (D, D)
    wkv_t = jnp.concatenate([wk.T, wv.T], axis=1)          # (D, 2D)
    bq_r = bq.reshape(1, D)
    bkv_r = jnp.concatenate([bk, bv]).reshape(1, 2 * D)

    # Query-dimension tiling: second (parallel) grid axis keeps both v7x
    # TensorCores busy when B is small and bounds per-step VMEM footprint.
    if block_q is None:
        block_q = Sq
        for cand in (512, 256, 128):
            if Sq % cand == 0:
                block_q = cand
                break
    assert Sq % block_q == 0
    grid = (B, Sq // block_q)

    has_mask = attention_mask is not None
    kernel = functools.partial(_cross_attention_kernel, num_heads=num_heads,
                               head_dim=head_dim, has_mask=has_mask)

    # Weight/bias index_maps are constant across the grid, so their tiles are
    # DMA'd once and stay resident across grid steps.
    in_specs = [
        pl.BlockSpec((1, block_q, D), lambda b, qi: (b, qi, 0)),   # decoder tile
        pl.BlockSpec((1, Sk, D), lambda b, qi: (b, 0, 0)),         # encoder (full Sk)
        pl.BlockSpec((D, D), lambda b, qi: (0, 0)),                # Wq^T
        pl.BlockSpec((1, D), lambda b, qi: (0, 0)),                # bq
        pl.BlockSpec((D, 2 * D), lambda b, qi: (0, 0)),            # [Wk^T | Wv^T]
        pl.BlockSpec((1, 2 * D), lambda b, qi: (0, 0)),            # [bk | bv]
    ]
    args = [dec, enc, wq_t, bq_r, wkv_t, bkv_r]

    if has_mask:
        # torch-style additive mask, broadcast to (B, 1, Sq, Sk); shared by all heads.
        # TODO(synk): per-head masks of shape (B, H, Sq, Sk) are not supported here.
        mask = jnp.broadcast_to(attention_mask, (B, 1, Sq, Sk))[:, 0]
        mask = mask.astype(jnp.float32)
        in_specs.append(pl.BlockSpec((1, block_q, Sk), lambda b, qi: (b, qi, 0)))
        args.append(mask)
    # else: no zero-mask stream is materialized or DMA'd at all.

    return pl.pallas_call(
        kernel,
        out_shape=jax.ShapeDtypeStruct((B, Sq, D), dec.dtype),
        grid=grid,
        in_specs=in_specs,
        out_specs=pl.BlockSpec((1, block_q, D), lambda b, qi: (b, qi, 0)),
        compiler_params=pltpu.CompilerParams(
            dimension_semantics=("parallel", "parallel"),
            vmem_limit_bytes=vmem_limit_bytes),
    )(*args)


def reference_cross_attention(dec, enc, params, attention_mask, num_heads):
    """Plain-JAX mirror of the PyTorch forward (eval mode) for verification."""
    B, Sq, D = dec.shape
    _, Sk, _ = enc.shape
    Dh = D // num_heads
    wq, bq, wk, bk, wv, bv = params
    q = dec @ wq.T + bq
    k = enc @ wk.T + bk
    v = enc @ wv.T + bv

    def split(x, S):
        return x.reshape(B, S, num_heads, Dh).transpose(0, 2, 1, 3)

    qh, kh, vh = split(q, Sq), split(k, Sk), split(v, Sk)
    scores = jnp.einsum("bhqd,bhkd->bhqk", qh, kh) / math.sqrt(Dh)
    if attention_mask is not None:
        scores = scores + attention_mask
    probs = jax.nn.softmax(scores, axis=-1)
    ctx = jnp.einsum("bhqk,bhkd->bhqd", probs, vh)
    return ctx.transpose(0, 2, 1, 3).reshape(B, Sq, D)


if __name__ == "__main__":
    # Small, module-consistent shapes.
    B, Sq, Sk = 2, 8, 12
    d_model, num_heads = 32, 4

    key = jax.random.PRNGKey(0)
    kd, ke, k1, k2, k3, k4, k5, k6 = jax.random.split(key, 8)

    dec = jax.random.normal(kd, (B, Sq, d_model), jnp.float32)
    enc = jax.random.normal(ke, (B, Sk, d_model), jnp.float32)

    scale = 1.0 / math.sqrt(d_model)
    params = (
        jax.random.uniform(k1, (d_model, d_model), jnp.float32, -scale, scale),  # Wq
        jax.random.uniform(k2, (d_model,), jnp.float32, -scale, scale),          # bq
        jax.random.uniform(k3, (d_model, d_model), jnp.float32, -scale, scale),  # Wk
        jax.random.uniform(k4, (d_model,), jnp.float32, -scale, scale),          # bk
        jax.random.uniform(k5, (d_model, d_model), jnp.float32, -scale, scale),  # Wv
        jax.random.uniform(k6, (d_model,), jnp.float32, -scale, scale),          # bv
    )

    # torch-style additive mask (B, 1, Sq, Sk): block the last two encoder positions.
    mask = jnp.zeros((B, 1, Sq, Sk), jnp.float32).at[:, :, :, -2:].set(-1e9)

    # Masked path.
    out = cross_attention(dec, enc, params, mask, num_heads=num_heads)
    out = jax.block_until_ready(out)
    ref = reference_cross_attention(dec, enc, params, mask, num_heads)
    assert out.shape == (B, Sq, d_model)
    assert jnp.allclose(out, ref, atol=2e-3, rtol=2e-3), "mismatch vs reference (masked)"

    # No-mask path (exercises the variant that skips the mask stream entirely).
    out_nm = cross_attention(dec, enc, params, None, num_heads=num_heads)
    out_nm = jax.block_until_ready(out_nm)
    ref_nm = reference_cross_attention(dec, enc, params, None, num_heads)
    assert jnp.allclose(out_nm, ref_nm, atol=2e-3, rtol=2e-3), "mismatch vs reference (no mask)"

    print("KERNEL_OK")
</pallas_src>

<mosaic_0001>
module attributes {stable_mosaic.version = 11 : i64} {
  func.func @_cross_attention_kernel(%arg0: i32, %arg1: i32, %arg2: memref<1x8x32xf32, #tpu.memory_space<vmem>>, %arg3: memref<1x12x32xf32, #tpu.memory_space<vmem>>, %arg4: memref<32x32xf32, #tpu.memory_space<vmem>>, %arg5: memref<1x32xf32, #tpu.memory_space<vmem>>, %arg6: memref<32x64xf32, #tpu.memory_space<vmem>>, %arg7: memref<1x64xf32, #tpu.memory_space<vmem>>, %arg8: memref<1x8x12xf32, #tpu.memory_space<vmem>>, %arg9: memref<1x8x32xf32, #tpu.memory_space<vmem>>) attributes {dimension_semantics = [#tpu.dimension_semantics<parallel>, #tpu.dimension_semantics<parallel>], iteration_bounds = array<i64: 2, 1>, scalar_prefetch = 0 : i64, scratch_operands = 0 : i64, tpu.core_type = #tpu.core_type<tc>, window_params = [{transform_indices = @transform_0, window_bounds = array<i64: 1, 8, 32>}, {transform_indices = @transform_1, window_bounds = array<i64: 1, 12, 32>}, {pipeline_mode = #tpu.pipeline_mode<synchronous>, transform_indices = @transform_2, window_bounds = array<i64: 32, 32>}, {pipeline_mode = #tpu.pipeline_mode<synchronous>, transform_indices = @transform_3, window_bounds = array<i64: 1, 32>}, {pipeline_mode = #tpu.pipeline_mode<synchronous>, transform_indices = @transform_4, window_bounds = array<i64: 32, 64>}, {pipeline_mode = #tpu.pipeline_mode<synchronous>, transform_indices = @transform_5, window_bounds = array<i64: 1, 64>}, {transform_indices = @transform_6, window_bounds = array<i64: 1, 8, 12>}, {transform_indices = @transform_7, window_bounds = array<i64: 1, 8, 32>}]} {
    %c0 = arith.constant 0 : index
    %c0_0 = arith.constant 0 : index
    %c0_1 = arith.constant 0 : index
    %0 = vector.load %arg2[%c0, %c0_0, %c0_1] : memref<1x8x32xf32, #tpu.memory_space<vmem>>, vector<1x8x32xf32>
    %1 = vector.shape_cast %0 : vector<1x8x32xf32> to vector<8x32xf32>
    %c0_2 = arith.constant 0 : index
    %c0_3 = arith.constant 0 : index
    %c0_4 = arith.constant 0 : index
    %2 = vector.load %arg3[%c0_2, %c0_3, %c0_4] : memref<1x12x32xf32, #tpu.memory_space<vmem>>, vector<1x12x32xf32>
    %3 = vector.shape_cast %2 : vector<1x12x32xf32> to vector<12x32xf32>
    %c0_5 = arith.constant 0 : index
    %c0_6 = arith.constant 0 : index
    %4 = vector.load %arg4[%c0_5, %c0_6] : memref<32x32xf32, #tpu.memory_space<vmem>>, vector<32x32xf32>
    %cst = arith.constant dense<0.000000e+00> : vector<8x32xf32>
    %5 = tpu.matmul %1, %4, %cst {dimension_numbers = #tpu.dot_dimension_numbers<[1], [0], [0], [1], [0, 0, 1, 1], [], []>} : vector<8x32xf32>, vector<32x32xf32>, vector<8x32xf32> -> vector<8x32xf32>
    %c0_7 = arith.constant 0 : index
    %c0_8 = arith.constant 0 : index
    %6 = vector.load %arg5[%c0_7, %c0_8] : memref<1x32xf32, #tpu.memory_space<vmem>>, vector<1x32xf32>
    %7 = vector.shape_cast %6 : vector<1x32xf32> to vector<32xf32>
    %8 = vector.shape_cast %7 : vector<32xf32> to vector<1x32xf32>
    %9 = vector.broadcast %8 : vector<1x32xf32> to vector<8x32xf32>
    %10 = arith.addf %5, %9 : vector<8x32xf32>
    %cst_9 = arith.constant 0.353553385 : f32
    %11 = vector.broadcast %cst_9 : f32 to vector<8x32xf32>
    %12 = arith.mulf %10, %11 : vector<8x32xf32>
    %c0_10 = arith.constant 0 : index
    %c0_11 = arith.constant 0 : index
    %13 = vector.load %arg6[%c0_10, %c0_11] : memref<32x64xf32, #tpu.memory_space<vmem>>, vector<32x64xf32>
    %cst_12 = arith.constant dense<0.000000e+00> : vector<12x64xf32>
    %14 = tpu.matmul %3, %13, %cst_12 {dimension_numbers = #tpu.dot_dimension_numbers<[1], [0], [0], [1], [0, 0, 1, 1], [], []>} : vector<12x32xf32>, vector<32x64xf32>, vector<12x64xf32> -> vector<12x64xf32>
    %c0_13 = arith.constant 0 : index
    %c0_14 = arith.constant 0 : index
    %15 = vector.load %arg7[%c0_13, %c0_14] : memref<1x64xf32, #tpu.memory_space<vmem>>, vector<1x64xf32>
    %16 = vector.shape_cast %15 : vector<1x64xf32> to vector<64xf32>
    %17 = vector.shape_cast %16 : vector<64xf32> to vector<1x64xf32>
    %18 = vector.broadcast %17 : vector<1x64xf32> to vector<12x64xf32>
    %19 = arith.addf %14, %18 : vector<12x64xf32>
    %20 = vector.extract_strided_slice %19 {offsets = [0, 0], sizes = [12, 32], strides = [1, 1]} : vector<12x64xf32> to vector<12x32xf32>
    %21 = vector.extract_strided_slice %19 {offsets = [0, 32], sizes = [12, 32], strides = [1, 1]} : vector<12x64xf32> to vector<12x32xf32>
    %c0_15 = arith.constant 0 : index
    %c0_16 = arith.constant 0 : index
    %c0_17 = arith.constant 0 : index
    %22 = vector.load %arg8[%c0_15, %c0_16, %c0_17] : memref<1x8x12xf32, #tpu.memory_space<vmem>>, vector<1x8x12xf32>
    %23 = vector.shape_cast %22 : vector<1x8x12xf32> to vector<8x12xf32>
    %24 = vector.extract_strided_slice %12 {offsets = [0, 0], sizes = [8, 8], strides = [1, 1]} : vector<8x32xf32> to vector<8x8xf32>
    %25 = vector.extract_strided_slice %20 {offsets = [0, 0], sizes = [12, 8], strides = [1, 1]} : vector<12x32xf32> to vector<12x8xf32>
    %26 = vector.extract_strided_slice %21 {offsets = [0, 0], sizes = [12, 8], strides = [1, 1]} : vector<12x32xf32> to vector<12x8xf32>
    %cst_18 = arith.constant dense<0.000000e+00> : vector<8x12xf32>
    %27 = tpu.matmul %24, %25, %cst_18 {dimension_numbers = #tpu.dot_dimension_numbers<[1], [1], [0], [0], [0, 0, 1, 0], [], []>} : vector<8x8xf32>, vector<12x8xf32>, vector<8x12xf32> -> vector<8x12xf32>
    %28 = arith.addf %27, %23 : vector<8x12xf32>
    %cst_19 = arith.constant dense<0xFF800000> : vector<8xf32>
    %29 = vector.multi_reduction <maximumf>, %28, %cst_19 [1] : vector<8x12xf32> to vector<8xf32>
    %30 = vector.shape_cast %29 : vector<8xf32> to vector<8x1xf32>
    %31 = vector.broadcast %30 : vector<8x1xf32> to vector<8x12xf32>
    %32 = arith.subf %28, %31 : vector<8x12xf32>
    %33 = math.exp %32 : vector<8x12xf32>
    %cst_20 = arith.constant dense<0.000000e+00> : vector<8xf32>
    %34 = vector.multi_reduction <add>, %33, %cst_20 [1] : vector<8x12xf32> to vector<8xf32>
    %35 = vector.shape_cast %34 : vector<8xf32> to vector<8x1xf32>
    %36 = tpu.reciprocal %35 {approx = true} : vector<8x1xf32> -> vector<8x1xf32>
    %37 = vector.broadcast %36 : vector<8x1xf32> to vector<8x12xf32>
    %38 = arith.mulf %33, %37 : vector<8x12xf32>
    %cst_21 = arith.constant dense<0.000000e+00> : vector<8x8xf32>
    %39 = tpu.matmul %38, %26, %cst_21 {dimension_numbers = #tpu.dot_dimension_numbers<[1], [0], [0], [1], [0, 0, 1, 1], [], []>} : vector<8x12xf32>, vector<12x8xf32>, vector<8x8xf32> -> vector<8x8xf32>
    %40 = vector.extract_strided_slice %12 {offsets = [0, 8], sizes = [8, 8], strides = [1, 1]} : vector<8x32xf32> to vector<8x8xf32>
    %41 = vector.extract_strided_slice %20 {offsets = [0, 8], sizes = [12, 8], strides = [1, 1]} : vector<12x32xf32> to vector<12x8xf32>
    %42 = vector.extract_strided_slice %21 {offsets = [0, 8], sizes = [12, 8], strides = [1, 1]} : vector<12x32xf32> to vector<12x8xf32>
    %cst_22 = arith.constant dense<0.000000e+00> : vector<8x12xf32>
    %43 = tpu.matmul %40, %41, %cst_22 {dimension_numbers = #tpu.dot_dimension_numbers<[1], [1], [0], [0], [0, 0, 1, 0], [], []>} : vector<8x8xf32>, vector<12x8xf32>, vector<8x12xf32> -> vector<8x12xf32>
    %44 = arith.addf %43, %23 : vector<8x12xf32>
    %cst_23 = arith.constant dense<0xFF800000> : vector<8xf32>
    %45 = vector.multi_reduction <maximumf>, %44, %cst_23 [1] : vector<8x12xf32> to vector<8xf32>
    %46 = vector.shape_cast %45 : vector<8xf32> to vector<8x1xf32>
    %47 = vector.broadcast %46 : vector<8x1xf32> to vector<8x12xf32>
    %48 = arith.subf %44, %47 : vector<8x12xf32>
    %49 = math.exp %48 : vector<8x12xf32>
    %cst_24 = arith.constant dense<0.000000e+00> : vector<8xf32>
    %50 = vector.multi_reduction <add>, %49, %cst_24 [1] : vector<8x12xf32> to vector<8xf32>
    %51 = vector.shape_cast %50 : vector<8xf32> to vector<8x1xf32>
    %52 = tpu.reciprocal %51 {approx = true} : vector<8x1xf32> -> vector<8x1xf32>
    %53 = vector.broadcast %52 : vector<8x1xf32> to vector<8x12xf32>
    %54 = arith.mulf %49, %53 : vector<8x12xf32>
    %cst_25 = arith.constant dense<0.000000e+00> : vector<8x8xf32>
    %55 = tpu.matmul %54, %42, %cst_25 {dimension_numbers = #tpu.dot_dimension_numbers<[1], [0], [0], [1], [0, 0, 1, 1], [], []>} : vector<8x12xf32>, vector<12x8xf32>, vector<8x8xf32> -> vector<8x8xf32>
    %56 = vector.extract_strided_slice %12 {offsets = [0, 16], sizes = [8, 8], strides = [1, 1]} : vector<8x32xf32> to vector<8x8xf32>
    %57 = vector.extract_strided_slice %20 {offsets = [0, 16], sizes = [12, 8], strides = [1, 1]} : vector<12x32xf32> to vector<12x8xf32>
    %58 = vector.extract_strided_slice %21 {offsets = [0, 16], sizes = [12, 8], strides = [1, 1]} : vector<12x32xf32> to vector<12x8xf32>
    %cst_26 = arith.constant dense<0.000000e+00> : vector<8x12xf32>
    %59 = tpu.matmul %56, %57, %cst_26 {dimension_numbers = #tpu.dot_dimension_numbers<[1], [1], [0], [0], [0, 0, 1, 0], [], []>} : vector<8x8xf32>, vector<12x8xf32>, vector<8x12xf32> -> vector<8x12xf32>
    %60 = arith.addf %59, %23 : vector<8x12xf32>
    %cst_27 = arith.constant dense<0xFF800000> : vector<8xf32>
    %61 = vector.multi_reduction <maximumf>, %60, %cst_27 [1] : vector<8x12xf32> to vector<8xf32>
    %62 = vector.shape_cast %61 : vector<8xf32> to vector<8x1xf32>
    %63 = vector.broadcast %62 : vector<8x1xf32> to vector<8x12xf32>
    %64 = arith.subf %60, %63 : vector<8x12xf32>
    %65 = math.exp %64 : vector<8x12xf32>
    %cst_28 = arith.constant dense<0.000000e+00> : vector<8xf32>
    %66 = vector.multi_reduction <add>, %65, %cst_28 [1] : vector<8x12xf32> to vector<8xf32>
    %67 = vector.shape_cast %66 : vector<8xf32> to vector<8x1xf32>
    %68 = tpu.reciprocal %67 {approx = true} : vector<8x1xf32> -> vector<8x1xf32>
    %69 = vector.broadcast %68 : vector<8x1xf32> to vector<8x12xf32>
    %70 = arith.mulf %65, %69 : vector<8x12xf32>
    %cst_29 = arith.constant dense<0.000000e+00> : vector<8x8xf32>
    %71 = tpu.matmul %70, %58, %cst_29 {dimension_numbers = #tpu.dot_dimension_numbers<[1], [0], [0], [1], [0, 0, 1, 1], [], []>} : vector<8x12xf32>, vector<12x8xf32>, vector<8x8xf32> -> vector<8x8xf32>
    %72 = vector.extract_strided_slice %12 {offsets = [0, 24], sizes = [8, 8], strides = [1, 1]} : vector<8x32xf32> to vector<8x8xf32>
    %73 = vector.extract_strided_slice %20 {offsets = [0, 24], sizes = [12, 8], strides = [1, 1]} : vector<12x32xf32> to vector<12x8xf32>
    %74 = vector.extract_strided_slice %21 {offsets = [0, 24], sizes = [12, 8], strides = [1, 1]} : vector<12x32xf32> to vector<12x8xf32>
    %cst_30 = arith.constant dense<0.000000e+00> : vector<8x12xf32>
    %75 = tpu.matmul %72, %73, %cst_30 {dimension_numbers = #tpu.dot_dimension_numbers<[1], [1], [0], [0], [0, 0, 1, 0], [], []>} : vector<8x8xf32>, vector<12x8xf32>, vector<8x12xf32> -> vector<8x12xf32>
    %76 = arith.addf %75, %23 : vector<8x12xf32>
    %cst_31 = arith.constant dense<0xFF800000> : vector<8xf32>
    %77 = vector.multi_reduction <maximumf>, %76, %cst_31 [1] : vector<8x12xf32> to vector<8xf32>
    %78 = vector.shape_cast %77 : vector<8xf32> to vector<8x1xf32>
    %79 = vector.broadcast %78 : vector<8x1xf32> to vector<8x12xf32>
    %80 = arith.subf %76, %79 : vector<8x12xf32>
    %81 = math.exp %80 : vector<8x12xf32>
    %cst_32 = arith.constant dense<0.000000e+00> : vector<8xf32>
    %82 = vector.multi_reduction <add>, %81, %cst_32 [1] : vector<8x12xf32> to vector<8xf32>
    %83 = vector.shape_cast %82 : vector<8xf32> to vector<8x1xf32>
    %84 = tpu.reciprocal %83 {approx = true} : vector<8x1xf32> -> vector<8x1xf32>
    %85 = vector.broadcast %84 : vector<8x1xf32> to vector<8x12xf32>
    %86 = arith.mulf %81, %85 : vector<8x12xf32>
    %cst_33 = arith.constant dense<0.000000e+00> : vector<8x8xf32>
    %87 = tpu.matmul %86, %74, %cst_33 {dimension_numbers = #tpu.dot_dimension_numbers<[1], [0], [0], [1], [0, 0, 1, 1], [], []>} : vector<8x12xf32>, vector<12x8xf32>, vector<8x8xf32> -> vector<8x8xf32>
    %88 = tpu.concatenate %39, %55, %71, %87 in 1 : vector<8x8xf32>, vector<8x8xf32>, vector<8x8xf32>, vector<8x8xf32> -> vector<8x32xf32>
    %c0_34 = arith.constant 0 : index
    %c0_35 = arith.constant 0 : index
    %c0_36 = arith.constant 0 : index
    %89 = vector.load %arg9[%c0_34, %c0_35, %c0_36] : memref<1x8x32xf32, #tpu.memory_space<vmem>>, vector<1x8x32xf32>
    %90 = vector.shape_cast %89 : vector<1x8x32xf32> to vector<8x32xf32>
    %91 = vector.shape_cast %88 : vector<8x32xf32> to vector<1x8x32xf32>
    tpu.vector_store %arg9[%c0_34, %c0_35, %c0_36], %91 {strides = array<i32>} : memref<1x8x32xf32, #tpu.memory_space<vmem>>, vector<1x8x32xf32>,
    return
  }
  func.func @transform_0(%arg0: i32, %arg1: i32) -> (i32, i32, i32) {
    %c0_i32 = arith.constant 0 : i32
    %c0_i32_0 = arith.constant 0 : i32
    return %arg0, %arg1, %c0_i32 : i32, i32, i32
  }
  func.func @transform_1(%arg0: i32, %arg1: i32) -> (i32, i32, i32) {
    %c0_i32 = arith.constant 0 : i32
    %c0_i32_0 = arith.constant 0 : i32
    %c0_i32_1 = arith.constant 0 : i32
    return %arg0, %c0_i32, %c0_i32_0 : i32, i32, i32
  }
  func.func @transform_2(%arg0: i32, %arg1: i32) -> (i32, i32) {
    %c0_i32 = arith.constant 0 : i32
    %c0_i32_0 = arith.constant 0 : i32
    %c0_i32_1 = arith.constant 0 : i32
    return %c0_i32, %c0_i32_0 : i32, i32
  }
  func.func @transform_3(%arg0: i32, %arg1: i32) -> (i32, i32) {
    %c0_i32 = arith.constant 0 : i32
    %c0_i32_0 = arith.constant 0 : i32
    %c0_i32_1 = arith.constant 0 : i32
    return %c0_i32, %c0_i32_0 : i32, i32
  }
  func.func @transform_4(%arg0: i32, %arg1: i32) -> (i32, i32) {
    %c0_i32 = arith.constant 0 : i32
    %c0_i32_0 = arith.constant 0 : i32
    %c0_i32_1 = arith.constant 0 : i32
    return %c0_i32, %c0_i32_0 : i32, i32
  }
  func.func @transform_5(%arg0: i32, %arg1: i32) -> (i32, i32) {
    %c0_i32 = arith.constant 0 : i32
    %c0_i32_0 = arith.constant 0 : i32
    %c0_i32_1 = arith.constant 0 : i32
    return %c0_i32, %c0_i32_0 : i32, i32
  }
  func.func @transform_6(%arg0: i32, %arg1: i32) -> (i32, i32, i32) {
    %c0_i32 = arith.constant 0 : i32
    %c0_i32_0 = arith.constant 0 : i32
    return %arg0, %arg1, %c0_i32 : i32, i32, i32
  }
  func.func @transform_7(%arg0: i32, %arg1: i32) -> (i32, i32, i32) {
    %c0_i32 = arith.constant 0 : i32
    %c0_i32_0 = arith.constant 0 : i32
    return %arg0, %arg1, %c0_i32 : i32, i32, i32
  }
}

</mosaic_0001>

<llo_original>
// kernel: tpu_custom_call.1
$region0: #{tpu_custom_call.1}
  #allocation0 [shape = 'u32[]', space=smem, size = 0x4, offset = 0x4, fixed_abs, tag = 'smem constant byte address 0x4 - core index']
  #allocation1 [shape = 'u32[144,128]{1,0:T(1,128)}', space=vmem, size = 0x12000, scoped, tag = 'internal scratch']
  %s0 = inlined_call_operand.vmem [shape: f32[2,8,32], index: 0, kind: input, shape index: {}]
  %s1 = inlined_call_operand.vmem [shape: f32[2,12,32], index: 1, kind: input, shape index: {}]
  %s2 = inlined_call_operand.vmem [shape: f32[32,32], index: 2, kind: input, shape index: {}]
  %s3 = inlined_call_operand.vmem [shape: f32[1,32], index: 3, kind: input, shape index: {}]
  %s4 = inlined_call_operand.hbm [shape: f32[32,64], index: 4, kind: input, shape index: {}]
  %s5 = inlined_call_operand.hbm [shape: f32[1,64], index: 5, kind: input, shape index: {}]
  %s6 = inlined_call_operand.vmem [shape: f32[2,8,12], index: 6, kind: input, shape index: {}]
  %s7 = inlined_call_operand.hbm [shape: f32[2,8,32], index: 7, kind: output, shape index: {}]
  %s8 = sld [smem:[#allocation0]]
  $region69: #{tpu_custom_call.1} parent=0
    _
  %s10 = ssub.s32 1, %s8
  %s11 = scalar_select 0, %s10, %s8
  $region1: #{tpu_custom_call.1} parent=0
    #allocation2 [shape = 'u8[16384]{0}', space=vmem, size = 0x4000, scoped, tag = 'input window, operand 4, single buffered']
    #allocation3 [shape = 's32[2]{0}', space=sflag, size = 0x8, scoped, tag = 'scoped memory for tpu_custom_call.1']
    #allocation4 [shape = 's32[2]{0}', space=sflag, size = 0x8, scoped, tag = 'scoped memory for tpu_custom_call.1']
    #allocation5 [shape = 'u8[512]{0}', space=vmem, size = 0x400, scoped, tag = 'input window, operand 5, single buffered']
    #allocation6 [shape = 's32[1]{0}', space=sflag, size = 0x4, scoped, tag = 'scoped memory for tpu_custom_call.1']
    #allocation7 [shape = 'u8[8192]{0}', space=vmem, size = 0x2000, scoped, tag = 'output window, operand 0']
    %12 = vsyncpa [#allocation3], 0
    %13 = vsyncpa [#allocation6], 0
    %14 = vsyncpa [#allocation4], 0
    %s15 = scalar_lea.sflag [#allocation4], 1
    %16 = vsyncpa %s15, 0
    loop: start=0, step=1, limit=4
    $region2: #{tpu_custom_call.1} parent=1 // loop_pre_header
      _
    $region3: #{tpu_custom_call.1} parent=1 // loop_header
      %s18 = sphi 0, %s22
      %p19 = scmp.ge.s32.totalorder %s18, 4
      %s25 = sphi 0, %s37
      %s26 = sphi 0, %s33
      %s27 = sphi 0, %s25
      %s28 = sphi 0, %s26
      %s29 = sphi 0, %s27
      %s30 = sphi 0, %s28
      %s42 = sphi 0, %s44
      %s45 = sphi 0, %s42
      %s46 = sphi 0, %s45
      %s62 = sphi 0, %s46
      %s68 = sphi 0, %s70
      %s71 = sphi 0, %s68
      %s72 = sphi 0, %s71
      %s88 = sphi 0, %s72
      %s92 = sphi 0, %s92
      %s94 = sphi 0, %s92
      %s95 = sphi 0, %s94
      %s109 = sphi 0, %s95
      %s113 = sphi 0, %s113
      %s115 = sphi 0, %s113
      %s116 = sphi 0, %s115
      %s130 = sphi 0, %s116
      %s134 = sphi 0, %s134
      %s136 = sphi 0, %s134
      %s137 = sphi 0, %s136
      %s151 = sphi 0, %s137
      %s155 = sphi 0, %s155
      %s157 = sphi 0, %s155
      %s158 = sphi 0, %s157
      %s172 = sphi 0, %s158
      %s180 = sphi 0, %s182
      %s183 = sphi 0, %s180
      %s184 = sphi 0, %s183
      %s200 = sphi 0, %s184
      %s208 = sphi 0, %s210
      %s211 = sphi 0, %s208
      %s212 = sphi 0, %s211
      %s228 = sphi 0, %s212
    $region4: #{tpu_custom_call.1} parent=1 // loop_header_branch
      %21 = sbr.rel (%p19) target = $region8
    $region5: #{tpu_custom_call.1} parent=1 // loop_body
      %s23 = ssub.s32 %s18, 1
      %s24 = ssub.s32 %s18, 2
      %s31 = sadd.s32 1, %s26
      %p32 = scmp.ge.s32.totalorder %s31, 1
      %s33 = scalar_select %p32, 0, %s31
      %s34 = sadd.s32 1, %s25
      %s35 = scalar_select %p32, %s34, %s25
      %p36 = scmp.ge.s32.totalorder %s35, 2
      %s37 = scalar_select %p36, 0, %s35
      %s38 = ssub.s32 %s25, %s37
      %s39 = ssub.s32 %s26, %s33
      %s40 = sor.u32 %s38, %s39
      %p41 = scmp.eq.s32.totalorder %s40, 0
      %s43 = sadd.s32 %s42, 1
      %s44 = scalar_select %p41, %s42, %s43
      %p47 = pneg %p41
      %p48 = scmp.eq.s32.totalorder %s18, 1
      %p49 = por %p47, %p48
      %p50 = scmp.ne.s32.totalorder %s42, %s45
      %p51 = scmp.eq.s32.totalorder %s18, 0
      %p52 = por %p50, %p51
      %p53 = scmp.ne.s32.totalorder %s42, %s45
      %p54 = scmp.eq.s32.totalorder %s23, 1
      %p55 = por %p53, %p54
      %p56 = scmp.ne.s32.totalorder %s45, %s46
      %p57 = scmp.eq.s32.totalorder %s23, 0
      %p58 = por %p56, %p57
      %p59 = scmp.ne.s32.totalorder %s45, %s46
      %p60 = scmp.eq.s32.totalorder %s24, 1
      %p61 = por %p59, %p60
      %p63 = scmp.ne.s32.totalorder %s46, %s62
      %p64 = scmp.eq.s32.totalorder %s24, 0
      %p65 = por %p63, %p64
      %s66 = ssub.s32 %s25, %s37
      %p67 = scmp.eq.s32.totalorder %s66, 0
      %s69 = sadd.s32 %s68, 1
      %s70 = scalar_select %p67, %s68, %s69
      %p73 = pneg %p67
      %p74 = scmp.eq.s32.totalorder %s18, 1
      %p75 = por %p73, %p74
      %p76 = scmp.ne.s32.totalorder %s68, %s71
      %p77 = scmp.eq.s32.totalorder %s18, 0
      %p78 = por %p76, %p77
      %p79 = scmp.ne.s32.totalorder %s68, %s71
      %p80 = scmp.eq.s32.totalorder %s23, 1
      %p81 = por %p79, %p80
      %p82 = scmp.ne.s32.totalorder %s71, %s72
      %p83 = scmp.eq.s32.totalorder %s23, 0
      %p84 = por %p82, %p83
      %p85 = scmp.ne.s32.totalorder %s71, %s72
      %p86 = scmp.eq.s32.totalorder %s24, 1
      %p87 = por %p85, %p86
      %p89 = scmp.ne.s32.totalorder %s72, %s88
      %p90 = scmp.eq.s32.totalorder %s24, 0
      %p91 = por %p89, %p90
      %s93 = sadd.s32 %s92, 1
      %p96 = scmp.eq.s32.totalorder %s18, 1
      %p97 = scmp.ne.s32.totalorder %s92, %s94
      %p98 = scmp.eq.s32.totalorder %s18, 0
      %p99 = por %p97, %p98
      %p100 = scmp.ne.s32.totalorder %s92, %s94
      %p101 = scmp.eq.s32.totalorder %s23, 1
      %p102 = por %p100, %p101
      %p103 = scmp.ne.s32.totalorder %s94, %s95
      %p104 = scmp.eq.s32.totalorder %s23, 0
      %p105 = por %p103, %p104
      %p106 = scmp.ne.s32.totalorder %s94, %s95
      %p107 = scmp.eq.s32.totalorder %s24, 1
      %p108 = por %p106, %p107
      %p110 = scmp.ne.s32.totalorder %s95, %s109
      %p111 = scmp.eq.s32.totalorder %s24, 0
      %p112 = por %p110, %p111
      %s114 = sadd.s32 %s113, 1
      %p117 = scmp.eq.s32.totalorder %s18, 1
      %p118 = scmp.ne.s32.totalorder %s113, %s115
      %p119 = scmp.eq.s32.totalorder %s18, 0
      %p120 = por %p118, %p119
      %p121 = scmp.ne.s32.totalorder %s113, %s115
      %p122 = scmp.eq.s32.totalorder %s23, 1
      %p123 = por %p121, %p122
      %p124 = scmp.ne.s32.totalorder %s115, %s116
      %p125 = scmp.eq.s32.totalorder %s23, 0
      %p126 = por %p124, %p125
      %p127 = scmp.ne.s32.totalorder %s115, %s116
      %p128 = scmp.eq.s32.totalorder %s24, 1
      %p129 = por %p127, %p128
      %p131 = scmp.ne.s32.totalorder %s116, %s130
      %p132 = scmp.eq.s32.totalorder %s24, 0
      %p133 = por %p131, %p132
      %s135 = sadd.s32 %s134, 1
      %p138 = scmp.eq.s32.totalorder %s18, 1
      %p139 = scmp.ne.s32.totalorder %s134, %s136
      %p140 = scmp.eq.s32.totalorder %s18, 0
      %p141 = por %p139, %p140
      %p142 = scmp.ne.s32.totalorder %s134, %s136
      %p143 = scmp.eq.s32.totalorder %s23, 1
      %p144 = por %p142, %p143
      %p145 = scmp.ne.s32.totalorder %s136, %s137
      %p146 = scmp.eq.s32.totalorder %s23, 0
      %p147 = por %p145, %p146
      %p148 = scmp.ne.s32.totalorder %s136, %s137
      %p149 = scmp.eq.s32.totalorder %s24, 1
      %p150 = por %p148, %p149
      %p152 = scmp.ne.s32.totalorder %s137, %s151
      %p153 = scmp.eq.s32.totalorder %s24, 0
      %p154 = por %p152, %p153
      %s156 = sadd.s32 %s155, 1
      %p159 = scmp.eq.s32.totalorder %s18, 1
      %p160 = scmp.ne.s32.totalorder %s155, %s157
      %p161 = scmp.eq.s32.totalorder %s18, 0
      %p162 = por %p160, %p161
      %p163 = scmp.ne.s32.totalorder %s155, %s157
      %p164 = scmp.eq.s32.totalorder %s23, 1
      %p165 = por %p163, %p164
      %p166 = scmp.ne.s32.totalorder %s157, %s158
      %p167 = scmp.eq.s32.totalorder %s23, 0
      %p168 = por %p166, %p167
      %p169 = scmp.ne.s32.totalorder %s157, %s158
      %p170 = scmp.eq.s32.totalorder %s24, 1
      %p171 = por %p169, %p170
      %p173 = scmp.ne.s32.totalorder %s158, %s172
      %p174 = scmp.eq.s32.totalorder %s24, 0
      %p175 = por %p173, %p174
      %s176 = ssub.s32 %s25, %s37
      %s177 = ssub.s32 %s26, %s33
      %s178 = sor.u32 %s176, %s177
      %p179 = scmp.eq.s32.totalorder %s178, 0
      %s181 = sadd.s32 %s180, 1
      %s182 = scalar_select %p179, %s180, %s181
      %p185 = pneg %p179
      %p186 = scmp.eq.s32.totalorder %s18, 1
      %p187 = por %p185, %p186
      %p188 = scmp.ne.s32.totalorder %s180, %s183
      %p189 = scmp.eq.s32.totalorder %s18, 0
      %p190 = por %p188, %p189
      %p191 = scmp.ne.s32.totalorder %s180, %s183
      %p192 = scmp.eq.s32.totalorder %s23, 1
      %p193 = por %p191, %p192
      %p194 = scmp.ne.s32.totalorder %s183, %s184
      %p195 = scmp.eq.s32.totalorder %s23, 0
      %p196 = por %p194, %p195
      %p197 = scmp.ne.s32.totalorder %s183, %s184
      %p198 = scmp.eq.s32.totalorder %s24, 1
      %p199 = por %p197, %p198
      %p201 = scmp.ne.s32.totalorder %s184, %s200
      %p202 = scmp.eq.s32.totalorder %s24, 0
      %p203 = por %p201, %p202
      %s204 = ssub.s32 %s25, %s37
      %s205 = ssub.s32 %s26, %s33
      %s206 = sor.u32 %s204, %s205
      %p207 = scmp.eq.s32.totalorder %s206, 0
      %s209 = sadd.s32 %s208, 1
      %s210 = scalar_select %p207, %s208, %s209
      %p213 = pneg %p207
      %p214 = scmp.eq.s32.totalorder %s18, 1
      %p215 = por %p213, %p214
      %p216 = scmp.ne.s32.totalorder %s208, %s211
      %p217 = scmp.eq.s32.totalorder %s18, 0
      %p218 = por %p216, %p217
      %p219 = scmp.ne.s32.totalorder %s208, %s211
      %p220 = scmp.eq.s32.totalorder %s23, 1
      %p221 = por %p219, %p220
      %p222 = scmp.ne.s32.totalorder %s211, %s212
      %p223 = scmp.eq.s32.totalorder %s23, 0
      %p224 = por %p222, %p223
      %p225 = scmp.ne.s32.totalorder %s211, %s212
      %p226 = scmp.eq.s32.totalorder %s24, 1
      %p227 = por %p225, %p226
      %p229 = scmp.ne.s32.totalorder %s212, %s228
      %p230 = scmp.eq.s32.totalorder %s24, 0
      %p231 = por %p229, %p230
      %p232 = scmp.le.s32.totalorder 1, %s18
      %p233 = scmp.lt.s32.totalorder %s18, 3
      %p234 = pnand %p232, %p233
      %p235 = pneg %p234
      // Predicated region
      $region9: #{tpu_custom_call.1} parent=5 // pred_check
        _
      $region10: #{tpu_custom_call.1} parent=5 // pred_check_branch
        %237 = sbr.rel (%p234) target = $region12
      $region11: #{tpu_custom_call.1} parent=5 // pred_region
        %s238 = ssub.s32 %s18, 1
        // Predicated region
        $region13: #{tpu_custom_call.1} parent=11 // pred_check
          %p239 = pneg %p105
        $region14: #{tpu_custom_call.1} parent=11 // pred_check_branch
          %241 = sbr.rel (%p239) target = $region16
        $region15: #{tpu_custom_call.1} parent=11 // pred_region
          _
        $region16: #{tpu_custom_call.1} parent=11 // pred_fallthru
          _
        // Predicated region
        $region17: #{tpu_custom_call.1} parent=11 // pred_check
          %p242 = pneg %p126
        $region18: #{tpu_custom_call.1} parent=11 // pred_check_branch
          %244 = sbr.rel (%p242) target = $region20
        $region19: #{tpu_custom_call.1} parent=11 // pred_region
          _
        $region20: #{tpu_custom_call.1} parent=11 // pred_fallthru
          _
        // Predicated region
        $region21: #{tpu_custom_call.1} parent=11 // pred_check
          %p245 = pneg %p147
        $region22: #{tpu_custom_call.1} parent=11 // pred_check_branch
          %247 = sbr.rel (%p245) target = $region24
        $region23: #{tpu_custom_call.1} parent=11 // pred_region
          %s249 = ssub.s32 512, 512
          %250 = vsyncadd [#allocation3], %s249
          %s251 = sshll.u32 [#allocation2], 4
          %s252 = int_to_ptr.vmem [resolvable:$true] %s251
          %257 = dma.hbm_to_vmem [thread:$0]  %s4, 512, %s252, [#allocation3], 128, 128, 8
        $region24: #{tpu_custom_call.1} parent=11 // pred_fallthru
          _
        // Predicated region
        $region25: #{tpu_custom_call.1} parent=11 // pred_check
          %p258 = pneg %p168
        $region26: #{tpu_custom_call.1} parent=11 // pred_check_branch
          %260 = sbr.rel (%p258) target = $region28
        $region27: #{tpu_custom_call.1} parent=11 // pred_region
          %s262 = ssub.s32 16, 16
          %263 = vsyncadd [#allocation6], %s262
          %s265 = sshll.u32 [#allocation5], 4
          %s266 = int_to_ptr.vmem [resolvable:$true] %s265
          %268 = dma.hbm_to_vmem [thread:$0]  %s5, 16, %s266, [#allocation6]
        $region28: #{tpu_custom_call.1} parent=11 // pred_fallthru
          _
      $region12: #{tpu_custom_call.1} parent=5 // pred_fallthru
        _
      %p269 = scmp.lt.s32.totalorder %s18, 2
      // Predicated region
      $region29: #{tpu_custom_call.1} parent=5 // pred_check
        %p270 = pneg %p269
      $region30: #{tpu_custom_call.1} parent=5 // pred_check_branch
        %272 = sbr.rel (%p270) target = $region32
      $region31: #{tpu_custom_call.1} parent=5 // pred_region
        // Predicated region
        $region33: #{tpu_custom_call.1} parent=31 // pred_check
          %p273 = pneg %p52
        $region34: #{tpu_custom_call.1} parent=31 // pred_check_branch
          %275 = sbr.rel (%p273) target = $region36
        $region35: #{tpu_custom_call.1} parent=31 // pred_region
          %p276 = scmp.lt.s32.totalorder %s25, 1
          %s277 = scalar_select %p276, %s25, 1
          %p278 = scmp.lt.s32.totalorder %s26, 0
          %s279 = scalar_select %p278, %s26, 0
          %s280 = sadd.s32 %s279, %s277
          %s281 = smul.addr %s280, 8
          %s282 = scalar_lea.vmem %s0, %s281
        $region36: #{tpu_custom_call.1} parent=31 // pred_fallthru
          _
        // Predicated region
        $region37: #{tpu_custom_call.1} parent=31 // pred_check
          %p283 = pneg %p78
        $region38: #{tpu_custom_call.1} parent=31 // pred_check_branch
          %285 = sbr.rel (%p283) target = $region40
        $region39: #{tpu_custom_call.1} parent=31 // pred_region
          %p286 = scmp.lt.s32.totalorder %s25, 1
          %s287 = scalar_select %p286, %s25, 1
          %s288 = smul.addr %s287, 2
          %s289 = smul.addr %s288, 8
          %s290 = scalar_lea.vmem %s1, %s289
        $region40: #{tpu_custom_call.1} parent=31 // pred_fallthru
          _
        // Predicated region
        $region41: #{tpu_custom_call.1} parent=31 // pred_check
          %p291 = pneg %p190
        $region42: #{tpu_custom_call.1} parent=31 // pred_check_branch
          %293 = sbr.rel (%p291) target = $region44
        $region43: #{tpu_custom_call.1} parent=31 // pred_region
          %p294 = scmp.lt.s32.totalorder %s25, 1
          %s295 = scalar_select %p294, %s25, 1
          %p296 = scmp.lt.s32.totalorder %s26, 0
          %s297 = scalar_select %p296, %s26, 0
          %s298 = sadd.s32 %s297, %s295
          %s299 = smul.addr %s298, 8
          %s300 = scalar_lea.vmem %s6, %s299
        $region44: #{tpu_custom_call.1} parent=31 // pred_fallthru
          _
      $region32: #{tpu_custom_call.1} parent=5 // pred_fallthru
        _
      %p301 = scmp.le.s32.totalorder 1, %s18
      %p302 = scmp.lt.s32.totalorder %s18, 3
      %p303 = pnand %p301, %p302
      %p304 = pneg %p303
      // Predicated region
      $region45: #{tpu_custom_call.1} parent=5 // pred_check
        _
      $region46: #{tpu_custom_call.1} parent=5 // pred_check_branch
        %306 = sbr.rel (%p303) target = $region48
      $region47: #{tpu_custom_call.1} parent=5 // pred_region
        %s307 = ssub.s32 %s18, 1
        // Predicated region
        $region49: #{tpu_custom_call.1} parent=47 // pred_check
          %p308 = pneg %p147
        $region50: #{tpu_custom_call.1} parent=47 // pred_check_branch
          %310 = sbr.rel (%p308) target = $region52
        $region51: #{tpu_custom_call.1} parent=47 // pred_region
          %311 = dma.done [#allocation3], 512
        $region52: #{tpu_custom_call.1} parent=47 // pred_fallthru
          _
        // Predicated region
        $region53: #{tpu_custom_call.1} parent=47 // pred_check
          %p312 = pneg %p168
        $region54: #{tpu_custom_call.1} parent=47 // pred_check_branch
          %314 = sbr.rel (%p312) target = $region56
        $region55: #{tpu_custom_call.1} parent=47 // pred_region
          %315 = dma.done [#allocation6], 16
        $region56: #{tpu_custom_call.1} parent=47 // pred_fallthru
          _
        %p316 = scmp.lt.s32.totalorder %s27, 1
        %s317 = scalar_select %p316, %s27, 1
        %p318 = scmp.lt.s32.totalorder %s28, 0
        %s319 = scalar_select %p318, %s28, 0
        %s320 = sadd.s32 %s319, %s317
        %s321 = smul.addr %s320, 8
        %s322 = scalar_lea.vmem %s0, %s321
        %p323 = pneg %p58
        %p324 = pneg %p55
        %p325 = scmp.lt.s32.totalorder %s27, 1
        %s326 = scalar_select %p325, %s27, 1
        %s327 = smul.addr %s326, 2
        %s328 = smul.addr %s327, 8
        %s329 = scalar_lea.vmem %s1, %s328
        %p330 = pneg %p84
        %p331 = pneg %p81
        %p332 = pneg %p105
        %p333 = pneg %p102
        %p334 = pneg %p126
        %p335 = pneg %p123
        %p336 = pneg %p147
        %p337 = pneg %p144
        %p338 = pneg %p168
        %p339 = pneg %p165
        %p340 = scmp.lt.s32.totalorder %s27, 1
        %s341 = scalar_select %p340, %s27, 1
        %p342 = scmp.lt.s32.totalorder %s28, 0
        %s343 = scalar_select %p342, %s28, 0
        %s344 = sadd.s32 %s343, %s341
        %s345 = smul.addr %s344, 8
        %s346 = scalar_lea.vmem %s6, %s345
        %p347 = pneg %p196
        %p348 = pneg %p193
        %p349 = pneg %p224
        %p350 = pneg %p221
        %s351 = sand.u32 %s211, 1
        %s352 = scalar_lea.sflag [#allocation4], %s351
        %s353 = sand.u32 %s211, 1
        %s354 = smul.addr %s353, 8
        %s355 = scalar_lea.vmem [#allocation7], %s354
        %p356 = scmp.lt.s32.totalorder %s27, 1
        %s357 = scalar_select %p356, %s27, 1
        %p358 = scmp.lt.s32.totalorder %s28, 0
        %s359 = scalar_select %p358, %s28, 0
        %s360 = sadd.s32 %s359, %s357
        %s361 = smul.addr %s360, 8
        %s362 = scalar_lea.vmem %s0, %s361
        %p363 = scmp.lt.s32.totalorder %s27, 1
        %s364 = scalar_select %p363, %s27, 1
        %s365 = smul.addr %s364, 2
        %s366 = smul.addr %s365, 8
        %s367 = scalar_lea.vmem %s1, %s366
        %p368 = scmp.lt.s32.totalorder %s27, 1
        %s369 = scalar_select %p368, %s27, 1
        %p370 = scmp.lt.s32.totalorder %s28, 0
        %s371 = scalar_select %p370, %s28, 0
        %s372 = sadd.s32 %s371, %s369
        %s373 = smul.addr %s372, 8
        %s374 = scalar_lea.vmem %s6, %s373
        %v375 = vld [vmem:[%s362] sm:$0xff]
        %v376 = vld [vmem:[%s367] sm:$0xff]
        %v377 = vld [vmem:[%s367 + $0x8] sm:$0xf]
        %v378 = vld [vmem:[%s2] sm:$0xff]
        %v379 = vld [vmem:[%s2 + $0x8] sm:$0xff]
        %v380 = vld [vmem:[%s2 + $0x10] sm:$0xff]
        %v381 = vld [vmem:[%s2 + $0x18] sm:$0xff]
        %v382 = vld [vmem:[%s3] sm:$0x1]
        %v384 = vlaneseq
        %v385 = vshrl.u32 %v384, 7
        %v386 = vsub.s32 0, %v385
        %v387 = vrot.slane %v382, %v386
        %vm389 = vcmask 261120
        %v391 = vsel %vm389, %v375, 0
        %393 = vmatprep.subr.mxu0 0.0
        %394 = vmatpush1.msra.mxu0 0.0
        %395 = vmatprep.subr.mxu0 0.0
        %396 = vmatpush1.msra.mxu0 0.0
        %397 = vmatprep.subr.mxu0 0.0
        %398 = vmatpush1.msra.mxu0 0.0
        %399 = vmatprep.subr.mxu0 0.0
        %400 = vmatpush1.msra.mxu0 0.0
        %401 = vmatprep.subr.mxu0 0.0
        %402 = vmatpush1.msra.mxu0 0.0
        %403 = vmatprep.subr.mxu0 0.0
        %404 = vmatpush1.msra.mxu0 0.0
        %405 = vmatprep.subr.mxu0 0.0
        %406 = vmatpush1.msra.mxu0 0.0
        %407 = vmatprep.subr.mxu0 0.0
        %408 = vmatpush1.msra.mxu0 0.0
        %409 = vmatprep.subr.mxu0 0.0
        %410 = vmatpush1.msra.mxu0 0.0
        %411 = vmatprep.subr.mxu0 0.0
        %412 = vmatpush1.msra.mxu0 0.0
        %413 = vmatprep.subr.mxu0 0.0
        %414 = vmatpush1.msra.mxu0 0.0
        %415 = vmatprep.subr.mxu0 0.0
        %416 = vmatpush1.msra.mxu0 0.0
        %417 = vmatprep.subr.mxu0 0.0
        %418 = vmatpush1.msra.mxu0 %v381
        %419 = vmatprep.subr.mxu0 0.0
        %420 = vmatpush1.msra.mxu0 %v380
        %421 = vmatprep.subr.mxu0 0.0
        %422 = vmatpush1.msra.mxu0 %v379
        %423 = vmatprep.subr.mxu0 0.0
        %424 = vmatpush1.msra.mxu0 %v378
        %425 = vmatprep.subr.mxu0 0.0
        %426 = vmatpush2.msra.mxu0 0.0
        %427 = vmatprep.subr.mxu0 0.0
        %428 = vmatpush2.msra.mxu0 0.0
        %429 = vmatprep.subr.mxu0 0.0
        %430 = vmatpush2.msra.mxu0 0.0
        %431 = vmatprep.subr.mxu0 0.0
        %432 = vmatpush2.msra.mxu0 0.0
        %433 = vmatprep.subr.mxu0 0.0
        %434 = vmatpush2.msra.mxu0 0.0
        %435 = vmatprep.subr.mxu0 0.0
        %436 = vmatpush2.msra.mxu0 0.0
        %437 = vmatprep.subr.mxu0 0.0
        %438 = vmatpush2.msra.mxu0 0.0
        %439 = vmatprep.subr.mxu0 0.0
        %440 = vmatpush2.msra.mxu0 0.0
        %441 = vmatprep.subr.mxu0 0.0
        %442 = vmatpush2.msra.mxu0 0.0
        %443 = vmatprep.subr.mxu0 0.0
        %444 = vmatpush2.msra.mxu0 0.0
        %445 = vmatprep.subr.mxu0 0.0
        %446 = vmatpush2.msra.mxu0 0.0
        %447 = vmatprep.subr.mxu0 0.0
        %448 = vmatpush2.msra.mxu0 0.0
        %449 = vmatprep.subr.mxu0 0.0
        %450 = vmatpush2.msra.mxu0 0.0
        %451 = vmatprep.subr.mxu0 0.0
        %452 = vmatpush2.msra.mxu0 0.0
        %453 = vmatprep.subr.mxu0 0.0
        %454 = vmatpush2.msra.mxu0 0.0
        %455 = vmatprep.subr.mxu0 0.0
        %456 = vmatpush2.msra.mxu0 0.0
        %457 = vmatprep.mubr.f32.mxu0 0.0
        %458 = vmatmul.mubr.f32.gmra.mxu0 %v391
        %v459 = vpop.f32.mrf.mxu0
        %v460 = vadd.f32 %v387, %v459
        %v461 = vpop.f32.mrf.mxu0
        %462 = vdwg.mxu0
        %v463 = vmul.f32 %v460, 0.35355338
        %v464 = vld [vmem:[#allocation2] sm:$0xff]
        %v465 = vld [vmem:[#allocation2 + $0x8] sm:$0xff]
        %v466 = vld [vmem:[#allocation2 + $0x10] sm:$0xff]
        %v467 = vld [vmem:[#allocation2 + $0x18] sm:$0xff]
        %v468 = vld [vmem:[#allocation5] sm:$0x1]
        %v470 = vlaneseq
        %v471 = vshrl.u32 %v470, 7
        %v472 = vsub.s32 0, %v471
        %v473 = vrot.slane %v468, %v472
        %v476 = vsel %vm389, %v376, 0
        %v479 = vsel %vm389, %v377, 0
        %481 = vmatprep.subr.mxu0 0.0
        %482 = vmatpush1.msra.mxu0 0.0
        %483 = vmatprep.subr.mxu0 0.0
        %484 = vmatpush1.msra.mxu0 0.0
        %485 = vmatprep.subr.mxu0 0.0
        %486 = vmatpush1.msra.mxu0 0.0
        %487 = vmatprep.subr.mxu0 0.0
        %488 = vmatpush1.msra.mxu0 0.0
        %489 = vmatprep.subr.mxu0 0.0
        %490 = vmatpush1.msra.mxu0 0.0
        %491 = vmatprep.subr.mxu0 0.0
        %492 = vmatpush1.msra.mxu0 0.0
        %493 = vmatprep.subr.mxu0 0.0
        %494 = vmatpush1.msra.mxu0 0.0
        %495 = vmatprep.subr.mxu0 0.0
        %496 = vmatpush1.msra.mxu0 0.0
        %497 = vmatprep.subr.mxu0 0.0
        %498 = vmatpush1.msra.mxu0 0.0
        %499 = vmatprep.subr.mxu0 0.0
        %500 = vmatpush1.msra.mxu0 0.0
        %501 = vmatprep.subr.mxu0 0.0
        %502 = vmatpush1.msra.mxu0 0.0
        %503 = vmatprep.subr.mxu0 0.0
        %504 = vmatpush1.msra.mxu0 0.0
        %505 = vmatprep.subr.mxu0 0.0
        %506 = vmatpush1.msra.mxu0 %v467
        %507 = vmatprep.subr.mxu0 0.0
        %508 = vmatpush1.msra.mxu0 %v466
        %509 = vmatprep.subr.mxu0 0.0
        %510 = vmatpush1.msra.mxu0 %v465
        %511 = vmatprep.subr.mxu0 0.0
        %512 = vmatpush1.msra.mxu0 %v464
        %513 = vmatprep.subr.mxu0 0.0
        %514 = vmatpush2.msra.mxu0 0.0
        %515 = vmatprep.subr.mxu0 0.0
        %516 = vmatpush2.msra.mxu0 0.0
        %517 = vmatprep.subr.mxu0 0.0
        %518 = vmatpush2.msra.mxu0 0.0
        %519 = vmatprep.subr.mxu0 0.0
        %520 = vmatpush2.msra.mxu0 0.0
        %521 = vmatprep.subr.mxu0 0.0
        %522 = vmatpush2.msra.mxu0 0.0
        %523 = vmatprep.subr.mxu0 0.0
        %524 = vmatpush2.msra.mxu0 0.0
        %525 = vmatprep.subr.mxu0 0.0
        %526 = vmatpush2.msra.mxu0 0.0
        %527 = vmatprep.subr.mxu0 0.0
        %528 = vmatpush2.msra.mxu0 0.0
        %529 = vmatprep.subr.mxu0 0.0
        %530 = vmatpush2.msra.mxu0 0.0
        %531 = vmatprep.subr.mxu0 0.0
        %532 = vmatpush2.msra.mxu0 0.0
        %533 = vmatprep.subr.mxu0 0.0
        %534 = vmatpush2.msra.mxu0 0.0
        %535 = vmatprep.subr.mxu0 0.0
        %536 = vmatpush2.msra.mxu0 0.0
        %537 = vmatprep.subr.mxu0 0.0
        %538 = vmatpush2.msra.mxu0 0.0
        %539 = vmatprep.subr.mxu0 0.0
        %540 = vmatpush2.msra.mxu0 0.0
        %541 = vmatprep.subr.mxu0 0.0
        %542 = vmatpush2.msra.mxu0 0.0
        %543 = vmatprep.subr.mxu0 0.0
        %544 = vmatpush2.msra.mxu0 0.0
        %545 = vmatprep.mubr.f32.mxu0 0.0
        %546 = vmatmul.mubr.f32.gmra.mxu0 %v476
        %v547 = vpop.f32.mrf.mxu0
        %v548 = vadd.f32 %v473, %v547
        %v549 = vpop.f32.mrf.mxu0
        %550 = vmatprep.mubr.f32.mxu0 0.0
        %551 = vmatmul.mubr.f32.gmra.mxu0 %v479
        %v552 = vpop.f32.mrf.mxu0
        %v553 = vadd.f32 %v473, %v552
        %v554 = vpop.f32.mrf.mxu0
        %555 = vdwg.mxu0
        %v556 = vld [vmem:[%s374] sm:$0xff]
        %vm557 = vcmask 64512
        %v559 = vsel %vm557, %v463, 0
        %v562 = vsel %vm557, %v548, 0
        %v565 = vsel %vm557, %v553, 0
        %567 = vmatprep.subr.mxu0 0.0
        %568 = vmatpush1.xpose.msra.mxu0 0.0
        %569 = vmatprep.subr.mxu0 0.0
        %570 = vmatpush1.xpose.msra.mxu0 0.0
        %571 = vmatprep.subr.mxu0 0.0
        %572 = vmatpush1.xpose.msra.mxu0 0.0
        %573 = vmatprep.subr.mxu0 0.0
        %574 = vmatpush1.xpose.msra.mxu0 0.0
        %575 = vmatprep.subr.mxu0 0.0
        %576 = vmatpush1.xpose.msra.mxu0 0.0
        %577 = vmatprep.subr.mxu0 0.0
        %578 = vmatpush1.xpose.msra.mxu0 0.0
        %579 = vmatprep.subr.mxu0 0.0
        %580 = vmatpush1.xpose.msra.mxu0 0.0
        %581 = vmatprep.subr.mxu0 0.0
        %582 = vmatpush1.xpose.msra.mxu0 0.0
        %583 = vmatprep.subr.mxu0 0.0
        %584 = vmatpush1.xpose.msra.mxu0 0.0
        %585 = vmatprep.subr.mxu0 0.0
        %586 = vmatpush1.xpose.msra.mxu0 0.0
        %587 = vmatprep.subr.mxu0 0.0
        %588 = vmatpush1.xpose.msra.mxu0 0.0
        %589 = vmatprep.subr.mxu0 0.0
        %590 = vmatpush1.xpose.msra.mxu0 0.0
        %591 = vmatprep.subr.mxu0 0.0
        %592 = vmatpush1.xpose.msra.mxu0 0.0
        %593 = vmatprep.subr.mxu0 0.0
        %594 = vmatpush1.xpose.msra.mxu0 0.0
        %595 = vmatprep.subr.mxu0 0.0
        %596 = vmatpush1.xpose.msra.mxu0 %v565
        %597 = vmatprep.subr.mxu0 0.0
        %598 = vmatpush1.xpose.msra.mxu0 %v562
        %599 = vmatprep.subr.mxu0 0.0
        %600 = vmatpush2.xpose.msra.mxu0 0.0
        %601 = vmatprep.subr.mxu0 0.0
        %602 = vmatpush2.xpose.msra.mxu0 0.0
        %603 = vmatprep.subr.mxu0 0.0
        %604 = vmatpush2.xpose.msra.mxu0 0.0
        %605 = vmatprep.subr.mxu0 0.0
        %606 = vmatpush2.xpose.msra.mxu0 0.0
        %607 = vmatprep.subr.mxu0 0.0
        %608 = vmatpush2.xpose.msra.mxu0 0.0
        %609 = vmatprep.subr.mxu0 0.0
        %610 = vmatpush2.xpose.msra.mxu0 0.0
        %611 = vmatprep.subr.mxu0 0.0
        %612 = vmatpush2.xpose.msra.mxu0 0.0
        %613 = vmatprep.subr.mxu0 0.0
        %614 = vmatpush2.xpose.msra.mxu0 0.0
        %615 = vmatprep.subr.mxu0 0.0
        %616 = vmatpush2.xpose.msra.mxu0 0.0
        %617 = vmatprep.subr.mxu0 0.0
        %618 = vmatpush2.xpose.msra.mxu0 0.0
        %619 = vmatprep.subr.mxu0 0.0
        %620 = vmatpush2.xpose.msra.mxu0 0.0
        %621 = vmatprep.subr.mxu0 0.0
        %622 = vmatpush2.xpose.msra.mxu0 0.0
        %623 = vmatprep.subr.mxu0 0.0
        %624 = vmatpush2.xpose.msra.mxu0 0.0
        %625 = vmatprep.subr.mxu0 0.0
        %626 = vmatpush2.xpose.msra.mxu0 0.0
        %627 = vmatprep.subr.mxu0 0.0
        %628 = vmatpush2.xpose.msra.mxu0 0.0
        %629 = vmatprep.subr.mxu0 0.0
        %630 = vmatpush2.xpose.msra.mxu0 0.0
        %631 = vmatprep.mubr.f32.mxu0 0.0
        %632 = vmatmul.mubr.f32.gmra.mxu0 %v559
        %v633 = vpop.f32.mrf.mxu0
        %v634 = vadd.f32 %v556, %v633
        %v635 = vpop.f32.mrf.mxu0
        %636 = vdwg.mxu0
        %vm637 = vcmask 97280
        %v638 = vsel %vm637, %v634, -inf
        %639 = vmax.xlane.f32.xlu0 %v638
        %v640 = vpop.xlane.xlu0 %639
        %v641 = vsub.f32 %v634, %v640
        %v642 = vmul.f32 %v641, 1.442695
        %v643 = vpow.pop %v642
        %v644 = vsel %vm637, %v643, 0.0
        %645 = vadd.xlane.f32.xlu0 %v644
        %v646 = vpop.xlane.xlu0 %645
        %v647 = vrcp.pop %v646
        %v648 = vmul.f32 %v643, %v647
        %649 = vrot.lane.b32.xlu0 %v548, 96
        %v650 = vpop.permute.xlu0 %649
        %651 = vrot.lane.b32.xlu0 %v553, 96
        %v652 = vpop.permute.xlu0 %651
        %v655 = vsel %vm637, %v648, 0
        %vm657 = vcmask 1043456
        %v658 = vsel %vm657, %v652, 0
        %660 = vmatprep.subr.mxu0 0.0
        %661 = vmatpush1.msra.mxu0 0.0
        %662 = vmatprep.subr.mxu0 0.0
        %663 = vmatpush1.msra.mxu0 0.0
        %664 = vmatprep.subr.mxu0 0.0
        %665 = vmatpush1.msra.mxu0 0.0
        %666 = vmatprep.subr.mxu0 0.0
        %667 = vmatpush1.msra.mxu0 0.0
        %668 = vmatprep.subr.mxu0 0.0
        %669 = vmatpush1.msra.mxu0 0.0
        %670 = vmatprep.subr.mxu0 0.0
        %671 = vmatpush1.msra.mxu0 0.0
        %672 = vmatprep.subr.mxu0 0.0
        %673 = vmatpush1.msra.mxu0 0.0
        %674 = vmatprep.subr.mxu0 0.0
        %675 = vmatpush1.msra.mxu0 0.0
        %676 = vmatprep.subr.mxu0 0.0
        %677 = vmatpush1.msra.mxu0 0.0
        %678 = vmatprep.subr.mxu0 0.0
        %679 = vmatpush1.msra.mxu0 0.0
        %680 = vmatprep.subr.mxu0 0.0
        %681 = vmatpush1.msra.mxu0 0.0
        %682 = vmatprep.subr.mxu0 0.0
        %683 = vmatpush1.msra.mxu0 0.0
        %684 = vmatprep.subr.mxu0 0.0
        %685 = vmatpush1.msra.mxu0 0.0
        %686 = vmatprep.subr.mxu0 0.0
        %687 = vmatpush1.msra.mxu0 0.0
        %688 = vmatprep.subr.mxu0 0.0
        %689 = vmatpush1.msra.mxu0 %v658
        %690 = vmatprep.subr.mxu0 0.0
        %691 = vmatpush1.msra.mxu0 %v650
        %692 = vmatprep.subr.mxu0 0.0
        %693 = vmatpush2.msra.mxu0 0.0
        %694 = vmatprep.subr.mxu0 0.0
        %695 = vmatpush2.msra.mxu0 0.0
        %696 = vmatprep.subr.mxu0 0.0
        %697 = vmatpush2.msra.mxu0 0.0
        %698 = vmatprep.subr.mxu0 0.0
        %699 = vmatpush2.msra.mxu0 0.0
        %700 = vmatprep.subr.mxu0 0.0
        %701 = vmatpush2.msra.mxu0 0.0
        %702 = vmatprep.subr.mxu0 0.0
        %703 = vmatpush2.msra.mxu0 0.0
        %704 = vmatprep.subr.mxu0 0.0
        %705 = vmatpush2.msra.mxu0 0.0
        %706 = vmatprep.subr.mxu0 0.0
        %707 = vmatpush2.msra.mxu0 0.0
        %708 = vmatprep.subr.mxu0 0.0
        %709 = vmatpush2.msra.mxu0 0.0
        %710 = vmatprep.subr.mxu0 0.0
        %711 = vmatpush2.msra.mxu0 0.0
        %712 = vmatprep.subr.mxu0 0.0
        %713 = vmatpush2.msra.mxu0 0.0
        %714 = vmatprep.subr.mxu0 0.0
        %715 = vmatpush2.msra.mxu0 0.0
        %716 = vmatprep.subr.mxu0 0.0
        %717 = vmatpush2.msra.mxu0 0.0
        %718 = vmatprep.subr.mxu0 0.0
        %719 = vmatpush2.msra.mxu0 0.0
        %720 = vmatprep.subr.mxu0 0.0
        %721 = vmatpush2.msra.mxu0 0.0
        %722 = vmatprep.subr.mxu0 0.0
        %723 = vmatpush2.msra.mxu0 0.0
        %724 = vmatprep.mubr.f32.mxu0 0.0
        %725 = vmatmul.mubr.f32.gmra.mxu0 %v655
        %v726 = vpop.f32.mrf.mxu0
        %v727 = vadd.f32 0.0, %v726
        %v728 = vpop.f32.mrf.mxu0
        %729 = vdwg.mxu0
        %730 = vrot.lane.b32.xlu0 %v463, 120
        %v731 = vpop.permute.xlu0 %730
        %732 = vrot.lane.b32.xlu0 %v548, 120
        %v733 = vpop.permute.xlu0 %732
        %734 = vrot.lane.b32.xlu0 %v553, 120
        %v735 = vpop.permute.xlu0 %734
        %v736 = vsel %vm557, %v731, 0
        %v738 = vsel %vm557, %v733, 0
        %v740 = vsel %vm557, %v735, 0
        %742 = vmatprep.subr.mxu0 0.0
        %743 = vmatpush1.xpose.msra.mxu0 0.0
        %744 = vmatprep.subr.mxu0 0.0
        %745 = vmatpush1.xpose.msra.mxu0 0.0
        %746 = vmatprep.subr.mxu0 0.0
        %747 = vmatpush1.xpose.msra.mxu0 0.0
        %748 = vmatprep.subr.mxu0 0.0
        %749 = vmatpush1.xpose.msra.mxu0 0.0
        %750 = vmatprep.subr.mxu0 0.0
        %751 = vmatpush1.xpose.msra.mxu0 0.0
        %752 = vmatprep.subr.mxu0 0.0
        %753 = vmatpush1.xpose.msra.mxu0 0.0
        %754 = vmatprep.subr.mxu0 0.0
        %755 = vmatpush1.xpose.msra.mxu0 0.0
        %756 = vmatprep.subr.mxu0 0.0
        %757 = vmatpush1.xpose.msra.mxu0 0.0
        %758 = vmatprep.subr.mxu0 0.0
        %759 = vmatpush1.xpose.msra.mxu0 0.0
        %760 = vmatprep.subr.mxu0 0.0
        %761 = vmatpush1.xpose.msra.mxu0 0.0
        %762 = vmatprep.subr.mxu0 0.0
        %763 = vmatpush1.xpose.msra.mxu0 0.0
        %764 = vmatprep.subr.mxu0 0.0
        %765 = vmatpush1.xpose.msra.mxu0 0.0
        %766 = vmatprep.subr.mxu0 0.0
        %767 = vmatpush1.xpose.msra.mxu0 0.0
        %768 = vmatprep.subr.mxu0 0.0
        %769 = vmatpush1.xpose.msra.mxu0 0.0
        %770 = vmatprep.subr.mxu0 0.0
        %771 = vmatpush1.xpose.msra.mxu0 %v740
        %772 = vmatprep.subr.mxu0 0.0
        %773 = vmatpush1.xpose.msra.mxu0 %v738
        %774 = vmatprep.subr.mxu0 0.0
        %775 = vmatpush2.xpose.msra.mxu0 0.0
        %776 = vmatprep.subr.mxu0 0.0
        %777 = vmatpush2.xpose.msra.mxu0 0.0
        %778 = vmatprep.subr.mxu0 0.0
        %779 = vmatpush2.xpose.msra.mxu0 0.0
        %780 = vmatprep.subr.mxu0 0.0
        %781 = vmatpush2.xpose.msra.mxu0 0.0
        %782 = vmatprep.subr.mxu0 0.0
        %783 = vmatpush2.xpose.msra.mxu0 0.0
        %784 = vmatprep.subr.mxu0 0.0
        %785 = vmatpush2.xpose.msra.mxu0 0.0
        %786 = vmatprep.subr.mxu0 0.0
        %787 = vmatpush2.xpose.msra.mxu0 0.0
        %788 = vmatprep.subr.mxu0 0.0
        %789 = vmatpush2.xpose.msra.mxu0 0.0
        %790 = vmatprep.subr.mxu0 0.0
        %791 = vmatpush2.xpose.msra.mxu0 0.0
        %792 = vmatprep.subr.mxu0 0.0
        %793 = vmatpush2.xpose.msra.mxu0 0.0
        %794 = vmatprep.subr.mxu0 0.0
        %795 = vmatpush2.xpose.msra.mxu0 0.0
        %796 = vmatprep.subr.mxu0 0.0
        %797 = vmatpush2.xpose.msra.mxu0 0.0
        %798 = vmatprep.subr.mxu0 0.0
        %799 = vmatpush2.xpose.msra.mxu0 0.0
        %800 = vmatprep.subr.mxu0 0.0
        %801 = vmatpush2.xpose.msra.mxu0 0.0
        %802 = vmatprep.subr.mxu0 0.0
        %803 = vmatpush2.xpose.msra.mxu0 0.0
        %804 = vmatprep.subr.mxu0 0.0
        %805 = vmatpush2.xpose.msra.mxu0 0.0
        %806 = vmatprep.mubr.f32.mxu0 0.0
        %807 = vmatmul.mubr.f32.gmra.mxu0 %v736
        %v808 = vpop.f32.mrf.mxu0
        %v809 = vadd.f32 %v556, %v808
        %v810 = vpop.f32.mrf.mxu0
        %811 = vdwg.mxu0
        %v812 = vsel %vm637, %v809, -inf
        %813 = vmax.xlane.f32.xlu0 %v812
        %v814 = vpop.xlane.xlu0 %813
        %v815 = vsub.f32 %v809, %v814
        %v816 = vmul.f32 %v815, 1.442695
        %v817 = vpow.pop %v816
        %v818 = vsel %vm637, %v817, 0.0
        %819 = vadd.xlane.f32.xlu0 %v818
        %v820 = vpop.xlane.xlu0 %819
        %v821 = vrcp.pop %v820
        %v822 = vmul.f32 %v817, %v821
        %823 = vrot.lane.b32.xlu0 %v548, 88
        %v824 = vpop.permute.xlu0 %823
        %825 = vrot.lane.b32.xlu0 %v553, 88
        %v826 = vpop.permute.xlu0 %825
        %v829 = vsel %vm637, %v822, 0
        %v831 = vsel %vm657, %v826, 0
        %833 = vmatprep.subr.mxu0 0.0
        %834 = vmatpush1.msra.mxu0 0.0
        %835 = vmatprep.subr.mxu0 0.0
        %836 = vmatpush1.msra.mxu0 0.0
        %837 = vmatprep.subr.mxu0 0.0
        %838 = vmatpush1.msra.mxu0 0.0
        %839 = vmatprep.subr.mxu0 0.0
        %840 = vmatpush1.msra.mxu0 0.0
        %841 = vmatprep.subr.mxu0 0.0
        %842 = vmatpush1.msra.mxu0 0.0
        %843 = vmatprep.subr.mxu0 0.0
        %844 = vmatpush1.msra.mxu0 0.0
        %845 = vmatprep.subr.mxu0 0.0
        %846 = vmatpush1.msra.mxu0 0.0
        %847 = vmatprep.subr.mxu0 0.0
        %848 = vmatpush1.msra.mxu0 0.0
        %849 = vmatprep.subr.mxu0 0.0
        %850 = vmatpush1.msra.mxu0 0.0
        %851 = vmatprep.subr.mxu0 0.0
        %852 = vmatpush1.msra.mxu0 0.0
        %853 = vmatprep.subr.mxu0 0.0
        %854 = vmatpush1.msra.mxu0 0.0
        %855 = vmatprep.subr.mxu0 0.0
        %856 = vmatpush1.msra.mxu0 0.0
        %857 = vmatprep.subr.mxu0 0.0
        %858 = vmatpush1.msra.mxu0 0.0
        %859 = vmatprep.subr.mxu0 0.0
        %860 = vmatpush1.msra.mxu0 0.0
        %861 = vmatprep.subr.mxu0 0.0
        %862 = vmatpush1.msra.mxu0 %v831
        %863 = vmatprep.subr.mxu0 0.0
        %864 = vmatpush1.msra.mxu0 %v824
        %865 = vmatprep.subr.mxu0 0.0
        %866 = vmatpush2.msra.mxu0 0.0
        %867 = vmatprep.subr.mxu0 0.0
        %868 = vmatpush2.msra.mxu0 0.0
        %869 = vmatprep.subr.mxu0 0.0
        %870 = vmatpush2.msra.mxu0 0.0
        %871 = vmatprep.subr.mxu0 0.0
        %872 = vmatpush2.msra.mxu0 0.0
        %873 = vmatprep.subr.mxu0 0.0
        %874 = vmatpush2.msra.mxu0 0.0
        %875 = vmatprep.subr.mxu0 0.0
        %876 = vmatpush2.msra.mxu0 0.0
        %877 = vmatprep.subr.mxu0 0.0
        %878 = vmatpush2.msra.mxu0 0.0
        %879 = vmatprep.subr.mxu0 0.0
        %880 = vmatpush2.msra.mxu0 0.0
        %881 = vmatprep.subr.mxu0 0.0
        %882 = vmatpush2.msra.mxu0 0.0
        %883 = vmatprep.subr.mxu0 0.0
        %884 = vmatpush2.msra.mxu0 0.0
        %885 = vmatprep.subr.mxu0 0.0
        %886 = vmatpush2.msra.mxu0 0.0
        %887 = vmatprep.subr.mxu0 0.0
        %888 = vmatpush2.msra.mxu0 0.0
        %889 = vmatprep.subr.mxu0 0.0
        %890 = vmatpush2.msra.mxu0 0.0
        %891 = vmatprep.subr.mxu0 0.0
        %892 = vmatpush2.msra.mxu0 0.0
        %893 = vmatprep.subr.mxu0 0.0
        %894 = vmatpush2.msra.mxu0 0.0
        %895 = vmatprep.subr.mxu0 0.0
        %896 = vmatpush2.msra.mxu0 0.0
        %897 = vmatprep.mubr.f32.mxu0 0.0
        %898 = vmatmul.mubr.f32.gmra.mxu0 %v829
        %v899 = vpop.f32.mrf.mxu0
        %v900 = vadd.f32 0.0, %v899
        %v901 = vpop.f32.mrf.mxu0
        %902 = vdwg.mxu0
        %903 = vrot.lane.b32.xlu0 %v463, 112
        %v904 = vpop.permute.xlu0 %903
        %905 = vrot.lane.b32.xlu0 %v548, 112
        %v906 = vpop.permute.xlu0 %905
        %907 = vrot.lane.b32.xlu0 %v553, 112
        %v908 = vpop.permute.xlu0 %907
        %v909 = vsel %vm557, %v904, 0
        %v911 = vsel %vm557, %v906, 0
        %v913 = vsel %vm557, %v908, 0
        %915 = vmatprep.subr.mxu0 0.0
        %916 = vmatpush1.xpose.msra.mxu0 0.0
        %917 = vmatprep.subr.mxu0 0.0
        %918 = vmatpush1.xpose.msra.mxu0 0.0
        %919 = vmatprep.subr.mxu0 0.0
        %920 = vmatpush1.xpose.msra.mxu0 0.0
        %921 = vmatprep.subr.mxu0 0.0
        %922 = vmatpush1.xpose.msra.mxu0 0.0
        %923 = vmatprep.subr.mxu0 0.0
        %924 = vmatpush1.xpose.msra.mxu0 0.0
        %925 = vmatprep.subr.mxu0 0.0
        %926 = vmatpush1.xpose.msra.mxu0 0.0
        %927 = vmatprep.subr.mxu0 0.0
        %928 = vmatpush1.xpose.msra.mxu0 0.0
        %929 = vmatprep.subr.mxu0 0.0
        %930 = vmatpush1.xpose.msra.mxu0 0.0
        %931 = vmatprep.subr.mxu0 0.0
        %932 = vmatpush1.xpose.msra.mxu0 0.0
        %933 = vmatprep.subr.mxu0 0.0
        %934 = vmatpush1.xpose.msra.mxu0 0.0
        %935 = vmatprep.subr.mxu0 0.0
        %936 = vmatpush1.xpose.msra.mxu0 0.0
        %937 = vmatprep.subr.mxu0 0.0
        %938 = vmatpush1.xpose.msra.mxu0 0.0
        %939 = vmatprep.subr.mxu0 0.0
        %940 = vmatpush1.xpose.msra.mxu0 0.0
        %941 = vmatprep.subr.mxu0 0.0
        %942 = vmatpush1.xpose.msra.mxu0 0.0
        %943 = vmatprep.subr.mxu0 0.0
        %944 = vmatpush1.xpose.msra.mxu0 %v913
        %945 = vmatprep.subr.mxu0 0.0
        %946 = vmatpush1.xpose.msra.mxu0 %v911
        %947 = vmatprep.subr.mxu0 0.0
        %948 = vmatpush2.xpose.msra.mxu0 0.0
        %949 = vmatprep.subr.mxu0 0.0
        %950 = vmatpush2.xpose.msra.mxu0 0.0
        %951 = vmatprep.subr.mxu0 0.0
        %952 = vmatpush2.xpose.msra.mxu0 0.0
        %953 = vmatprep.subr.mxu0 0.0
        %954 = vmatpush2.xpose.msra.mxu0 0.0
        %955 = vmatprep.subr.mxu0 0.0
        %956 = vmatpush2.xpose.msra.mxu0 0.0
        %957 = vmatprep.subr.mxu0 0.0
        %958 = vmatpush2.xpose.msra.mxu0 0.0
        %959 = vmatprep.subr.mxu0 0.0
        %960 = vmatpush2.xpose.msra.mxu0 0.0
        %961 = vmatprep.subr.mxu0 0.0
        %962 = vmatpush2.xpose.msra.mxu0 0.0
        %963 = vmatprep.subr.mxu0 0.0
        %964 = vmatpush2.xpose.msra.mxu0 0.0
        %965 = vmatprep.subr.mxu0 0.0
        %966 = vmatpush2.xpose.msra.mxu0 0.0
        %967 = vmatprep.subr.mxu0 0.0
        %968 = vmatpush2.xpose.msra.mxu0 0.0
        %969 = vmatprep.subr.mxu0 0.0
        %970 = vmatpush2.xpose.msra.mxu0 0.0
        %971 = vmatprep.subr.mxu0 0.0
        %972 = vmatpush2.xpose.msra.mxu0 0.0
        %973 = vmatprep.subr.mxu0 0.0
        %974 = vmatpush2.xpose.msra.mxu0 0.0
        %975 = vmatprep.subr.mxu0 0.0
        %976 = vmatpush2.xpose.msra.mxu0 0.0
        %977 = vmatprep.subr.mxu0 0.0
        %978 = vmatpush2.xpose.msra.mxu0 0.0
        %979 = vmatprep.mubr.f32.mxu0 0.0
        %980 = vmatmul.mubr.f32.gmra.mxu0 %v909
        %v981 = vpop.f32.mrf.mxu0
        %v982 = vadd.f32 %v556, %v981
        %v983 = vpop.f32.mrf.mxu0
        %984 = vdwg.mxu0
        %v985 = vsel %vm637, %v982, -inf
        %986 = vmax.xlane.f32.xlu0 %v985
        %v987 = vpop.xlane.xlu0 %986
        %v988 = vsub.f32 %v982, %v987
        %v989 = vmul.f32 %v988, 1.442695
        %v990 = vpow.pop %v989
        %v991 = vsel %vm637, %v990, 0.0
        %992 = vadd.xlane.f32.xlu0 %v991
        %v993 = vpop.xlane.xlu0 %992
        %v994 = vrcp.pop %v993
        %v995 = vmul.f32 %v990, %v994
        %996 = vrot.lane.b32.xlu0 %v548, 80
        %v997 = vpop.permute.xlu0 %996
        %998 = vrot.lane.b32.xlu0 %v553, 80
        %v999 = vpop.permute.xlu0 %998
        %v1002 = vsel %vm637, %v995, 0
        %v1004 = vsel %vm657, %v999, 0
        %1006 = vmatprep.subr.mxu0 0.0
        %1007 = vmatpush1.msra.mxu0 0.0
        %1008 = vmatprep.subr.mxu0 0.0
        %1009 = vmatpush1.msra.mxu0 0.0
        %1010 = vmatprep.subr.mxu0 0.0
        %1011 = vmatpush1.msra.mxu0 0.0
        %1012 = vmatprep.subr.mxu0 0.0
        %1013 = vmatpush1.msra.mxu0 0.0
        %1014 = vmatprep.subr.mxu0 0.0
        %1015 = vmatpush1.msra.mxu0 0.0
        %1016 = vmatprep.subr.mxu0 0.0
        %1017 = vmatpush1.msra.mxu0 0.0
        %1018 = vmatprep.subr.mxu0 0.0
        %1019 = vmatpush1.msra.mxu0 0.0
        %1020 = vmatprep.subr.mxu0 0.0
        %1021 = vmatpush1.msra.mxu0 0.0
        %1022 = vmatprep.subr.mxu0 0.0
        %1023 = vmatpush1.msra.mxu0 0.0
        %1024 = vmatprep.subr.mxu0 0.0
        %1025 = vmatpush1.msra.mxu0 0.0
        %1026 = vmatprep.subr.mxu0 0.0
        %1027 = vmatpush1.msra.mxu0 0.0
        %1028 = vmatprep.subr.mxu0 0.0
        %1029 = vmatpush1.msra.mxu0 0.0
        %1030 = vmatprep.subr.mxu0 0.0
        %1031 = vmatpush1.msra.mxu0 0.0
        %1032 = vmatprep.subr.mxu0 0.0
        %1033 = vmatpush1.msra.mxu0 0.0
        %1034 = vmatprep.subr.mxu0 0.0
        %1035 = vmatpush1.msra.mxu0 %v1004
        %1036 = vmatprep.subr.mxu0 0.0
        %1037 = vmatpush1.msra.mxu0 %v997
        %1038 = vmatprep.subr.mxu0 0.0
        %1039 = vmatpush2.msra.mxu0 0.0
        %1040 = vmatprep.subr.mxu0 0.0
        %1041 = vmatpush2.msra.mxu0 0.0
        %1042 = vmatprep.subr.mxu0 0.0
        %1043 = vmatpush2.msra.mxu0 0.0
        %1044 = vmatprep.subr.mxu0 0.0
        %1045 = vmatpush2.msra.mxu0 0.0
        %1046 = vmatprep.subr.mxu0 0.0
        %1047 = vmatpush2.msra.mxu0 0.0
        %1048 = vmatprep.subr.mxu0 0.0
        %1049 = vmatpush2.msra.mxu0 0.0
        %1050 = vmatprep.subr.mxu0 0.0
        %1051 = vmatpush2.msra.mxu0 0.0
        %1052 = vmatprep.subr.mxu0 0.0
        %1053 = vmatpush2.msra.mxu0 0.0
        %1054 = vmatprep.subr.mxu0 0.0
        %1055 = vmatpush2.msra.mxu0 0.0
        %1056 = vmatprep.subr.mxu0 0.0
        %1057 = vmatpush2.msra.mxu0 0.0
        %1058 = vmatprep.subr.mxu0 0.0
        %1059 = vmatpush2.msra.mxu0 0.0
        %1060 = vmatprep.subr.mxu0 0.0
        %1061 = vmatpush2.msra.mxu0 0.0
        %1062 = vmatprep.subr.mxu0 0.0
        %1063 = vmatpush2.msra.mxu0 0.0
        %1064 = vmatprep.subr.mxu0 0.0
        %1065 = vmatpush2.msra.mxu0 0.0
        %1066 = vmatprep.subr.mxu0 0.0
        %1067 = vmatpush2.msra.mxu0 0.0
        %1068 = vmatprep.subr.mxu0 0.0
        %1069 = vmatpush2.msra.mxu0 0.0
        %1070 = vmatprep.mubr.f32.mxu0 0.0
        %1071 = vmatmul.mubr.f32.gmra.mxu0 %v1002
        %v1072 = vpop.f32.mrf.mxu0
        %v1073 = vadd.f32 0.0, %v1072
        %v1074 = vpop.f32.mrf.mxu0
        %1075 = vdwg.mxu0
        %1076 = vrot.lane.b32.xlu0 %v463, 104
        %v1077 = vpop.permute.xlu0 %1076
        %1078 = vrot.lane.b32.xlu0 %v548, 104
        %v1079 = vpop.permute.xlu0 %1078
        %1080 = vrot.lane.b32.xlu0 %v553, 104
        %v1081 = vpop.permute.xlu0 %1080
        %v1082 = vsel %vm557, %v1077, 0
        %v1084 = vsel %vm557, %v1079, 0
        %v1086 = vsel %vm557, %v1081, 0
        %1088 = vmatprep.subr.mxu0 0.0
        %1089 = vmatpush1.xpose.msra.mxu0 0.0
        %1090 = vmatprep.subr.mxu0 0.0
        %1091 = vmatpush1.xpose.msra.mxu0 0.0
        %1092 = vmatprep.subr.mxu0 0.0
        %1093 = vmatpush1.xpose.msra.mxu0 0.0
        %1094 = vmatprep.subr.mxu0 0.0
        %1095 = vmatpush1.xpose.msra.mxu0 0.0
        %1096 = vmatprep.subr.mxu0 0.0
        %1097 = vmatpush1.xpose.msra.mxu0 0.0
        %1098 = vmatprep.subr.mxu0 0.0
        %1099 = vmatpush1.xpose.msra.mxu0 0.0
        %1100 = vmatprep.subr.mxu0 0.0
        %1101 = vmatpush1.xpose.msra.mxu0 0.0
        %1102 = vmatprep.subr.mxu0 0.0
        %1103 = vmatpush1.xpose.msra.mxu0 0.0
        %1104 = vmatprep.subr.mxu0 0.0
        %1105 = vmatpush1.xpose.msra.mxu0 0.0
        %1106 = vmatprep.subr.mxu0 0.0
        %1107 = vmatpush1.xpose.msra.mxu0 0.0
        %1108 = vmatprep.subr.mxu0 0.0
        %1109 = vmatpush1.xpose.msra.mxu0 0.0
        %1110 = vmatprep.subr.mxu0 0.0
        %1111 = vmatpush1.xpose.msra.mxu0 0.0
        %1112 = vmatprep.subr.mxu0 0.0
        %1113 = vmatpush1.xpose.msra.mxu0 0.0
        %1114 = vmatprep.subr.mxu0 0.0
        %1115 = vmatpush1.xpose.msra.mxu0 0.0
        %1116 = vmatprep.subr.mxu0 0.0
        %1117 = vmatpush1.xpose.msra.mxu0 %v1086
        %1118 = vmatprep.subr.mxu0 0.0
        %1119 = vmatpush1.xpose.msra.mxu0 %v1084
        %1120 = vmatprep.subr.mxu0 0.0
        %1121 = vmatpush2.xpose.msra.mxu0 0.0
        %1122 = vmatprep.subr.mxu0 0.0
        %1123 = vmatpush2.xpose.msra.mxu0 0.0
        %1124 = vmatprep.subr.mxu0 0.0
        %1125 = vmatpush2.xpose.msra.mxu0 0.0
        %1126 = vmatprep.subr.mxu0 0.0
        %1127 = vmatpush2.xpose.msra.mxu0 0.0
        %1128 = vmatprep.subr.mxu0 0.0
        %1129 = vmatpush2.xpose.msra.mxu0 0.0
        %1130 = vmatprep.subr.mxu0 0.0
        %1131 = vmatpush2.xpose.msra.mxu0 0.0
        %1132 = vmatprep.subr.mxu0 0.0
        %1133 = vmatpush2.xpose.msra.mxu0 0.0
        %1134 = vmatprep.subr.mxu0 0.0
        %1135 = vmatpush2.xpose.msra.mxu0 0.0
        %1136 = vmatprep.subr.mxu0 0.0
        %1137 = vmatpush2.xpose.msra.mxu0 0.0
        %1138 = vmatprep.subr.mxu0 0.0
        %1139 = vmatpush2.xpose.msra.mxu0 0.0
        %1140 = vmatprep.subr.mxu0 0.0
        %1141 = vmatpush2.xpose.msra.mxu0 0.0
        %1142 = vmatprep.subr.mxu0 0.0
        %1143 = vmatpush2.xpose.msra.mxu0 0.0
        %1144 = vmatprep.subr.mxu0 0.0
        %1145 = vmatpush2.xpose.msra.mxu0 0.0
        %1146 = vmatprep.subr.mxu0 0.0
        %1147 = vmatpush2.xpose.msra.mxu0 0.0
        %1148 = vmatprep.subr.mxu0 0.0
        %1149 = vmatpush2.xpose.msra.mxu0 0.0
        %1150 = vmatprep.subr.mxu0 0.0
        %1151 = vmatpush2.xpose.msra.mxu0 0.0
        %1152 = vmatprep.mubr.f32.mxu0 0.0
        %1153 = vmatmul.mubr.f32.gmra.mxu0 %v1082
        %v1154 = vpop.f32.mrf.mxu0
        %v1155 = vadd.f32 %v556, %v1154
        %v1156 = vpop.f32.mrf.mxu0
        %1157 = vdwg.mxu0
        %v1158 = vsel %vm637, %v1155, -inf
        %1159 = vmax.xlane.f32.xlu0 %v1158
        %v1160 = vpop.xlane.xlu0 %1159
        %v1161 = vsub.f32 %v1155, %v1160
        %v1162 = vmul.f32 %v1161, 1.442695
        %v1163 = vpow.pop %v1162
        %v1164 = vsel %vm637, %v1163, 0.0
        %1165 = vadd.xlane.f32.xlu0 %v1164
        %v1166 = vpop.xlane.xlu0 %1165
        %v1167 = vrcp.pop %v1166
        %v1168 = vmul.f32 %v1163, %v1167
        %1169 = vrot.lane.b32.xlu0 %v548, 72
        %v1170 = vpop.permute.xlu0 %1169
        %1171 = vrot.lane.b32.xlu0 %v553, 72
        %v1172 = vpop.permute.xlu0 %1171
        %v1175 = vsel %vm637, %v1168, 0
        %v1177 = vsel %vm657, %v1172, 0
        %1179 = vmatprep.subr.mxu0 0.0
        %1180 = vmatpush1.msra.mxu0 0.0
        %1181 = vmatprep.subr.mxu0 0.0
        %1182 = vmatpush1.msra.mxu0 0.0
        %1183 = vmatprep.subr.mxu0 0.0
        %1184 = vmatpush1.msra.mxu0 0.0
        %1185 = vmatprep.subr.mxu0 0.0
        %1186 = vmatpush1.msra.mxu0 0.0
        %1187 = vmatprep.subr.mxu0 0.0
        %1188 = vmatpush1.msra.mxu0 0.0
        %1189 = vmatprep.subr.mxu0 0.0
        %1190 = vmatpush1.msra.mxu0 0.0
        %1191 = vmatprep.subr.mxu0 0.0
        %1192 = vmatpush1.msra.mxu0 0.0
        %1193 = vmatprep.subr.mxu0 0.0
        %1194 = vmatpush1.msra.mxu0 0.0
        %1195 = vmatprep.subr.mxu0 0.0
        %1196 = vmatpush1.msra.mxu0 0.0
        %1197 = vmatprep.subr.mxu0 0.0
        %1198 = vmatpush1.msra.mxu0 0.0
        %1199 = vmatprep.subr.mxu0 0.0
        %1200 = vmatpush1.msra.mxu0 0.0
        %1201 = vmatprep.subr.mxu0 0.0
        %1202 = vmatpush1.msra.mxu0 0.0
        %1203 = vmatprep.subr.mxu0 0.0
        %1204 = vmatpush1.msra.mxu0 0.0
        %1205 = vmatprep.subr.mxu0 0.0
        %1206 = vmatpush1.msra.mxu0 0.0
        %1207 = vmatprep.subr.mxu0 0.0
        %1208 = vmatpush1.msra.mxu0 %v1177
        %1209 = vmatprep.subr.mxu0 0.0
        %1210 = vmatpush1.msra.mxu0 %v1170
        %1211 = vmatprep.subr.mxu0 0.0
        %1212 = vmatpush2.msra.mxu0 0.0
        %1213 = vmatprep.subr.mxu0 0.0
        %1214 = vmatpush2.msra.mxu0 0.0
        %1215 = vmatprep.subr.mxu0 0.0
        %1216 = vmatpush2.msra.mxu0 0.0
        %1217 = vmatprep.subr.mxu0 0.0
        %1218 = vmatpush2.msra.mxu0 0.0
        %1219 = vmatprep.subr.mxu0 0.0
        %1220 = vmatpush2.msra.mxu0 0.0
        %1221 = vmatprep.subr.mxu0 0.0
        %1222 = vmatpush2.msra.mxu0 0.0
        %1223 = vmatprep.subr.mxu0 0.0
        %1224 = vmatpush2.msra.mxu0 0.0
        %1225 = vmatprep.subr.mxu0 0.0
        %1226 = vmatpush2.msra.mxu0 0.0
        %1227 = vmatprep.subr.mxu0 0.0
        %1228 = vmatpush2.msra.mxu0 0.0
        %1229 = vmatprep.subr.mxu0 0.0
        %1230 = vmatpush2.msra.mxu0 0.0
        %1231 = vmatprep.subr.mxu0 0.0
        %1232 = vmatpush2.msra.mxu0 0.0
        %1233 = vmatprep.subr.mxu0 0.0
        %1234 = vmatpush2.msra.mxu0 0.0
        %1235 = vmatprep.subr.mxu0 0.0
        %1236 = vmatpush2.msra.mxu0 0.0
        %1237 = vmatprep.subr.mxu0 0.0
        %1238 = vmatpush2.msra.mxu0 0.0
        %1239 = vmatprep.subr.mxu0 0.0
        %1240 = vmatpush2.msra.mxu0 0.0
        %1241 = vmatprep.subr.mxu0 0.0
        %1242 = vmatpush2.msra.mxu0 0.0
        %1243 = vmatprep.mubr.f32.mxu0 0.0
        %1244 = vmatmul.mubr.f32.gmra.mxu0 %v1175
        %v1245 = vpop.f32.mrf.mxu0
        %v1246 = vadd.f32 0.0, %v1245
        %v1247 = vpop.f32.mrf.mxu0
        %1248 = vdwg.mxu0
        %1250 = vrot.lane.b32.xlu0 %v900, 8
        %v1251 = vpop.permute.xlu0 %1250
        %1254 = vrot.lane.b32.xlu0 %v1073, 16
        %v1255 = vpop.permute.xlu0 %1254
        %1258 = vrot.lane.b32.xlu0 %v1246, 24
        %v1259 = vpop.permute.xlu0 %1258
        %v1261 = vsel %vm557, %v727, %v1251
        %vm1262 = vcmask 130048
        %v1263 = vsel %vm1262, %v1261, %v1255
        %vm1264 = vcmask 195584
        %v1265 = vsel %vm1264, %v1263, %v1259
        %1266 = vst.msk [vmem:[%s355] sm:$0xff] %vm389, %v1265
        %s1267 = sand.u32 %s211, 1
        %s1268 = scalar_lea.sflag [#allocation4], %s1267
        %s1269 = sand.u32 %s211, 1
        %s1270 = smul.addr %s1269, 8
        %s1271 = scalar_lea.vmem [#allocation7], %s1270
        // Predicated region
        $region57: #{tpu_custom_call.1} parent=47 // pred_check
          %p1272 = pneg %p221
        $region58: #{tpu_custom_call.1} parent=47 // pred_check_branch
          %1274 = sbr.rel (%p1272) target = $region60
        $region59: #{tpu_custom_call.1} parent=47 // pred_region
          %s1276 = ssub.s32 128, 128
          %1277 = vsyncadd %s1268, %s1276
          %s1278 = sadd.s32 %s28, %s27
          %s1279 = smul.addr %s1278, 128
          %s1280 = scalar_lea.hbm %s7, %s1279
          %s1282 = sshll.u32 %s1271, 4
          %s1283 = int_to_ptr.vmem [resolvable:$true] %s1282
          %1285 = dma.vmem_to_hbm [thread:$0]  %s1283, 128, %s1280, %s1268
        $region60: #{tpu_custom_call.1} parent=47 // pred_fallthru
          _
      $region48: #{tpu_custom_call.1} parent=5 // pred_fallthru
        _
      %p1286 = scmp.le.s32.totalorder 2, %s18
      // Predicated region
      $region61: #{tpu_custom_call.1} parent=5 // pred_check
        %p1287 = pneg %p1286
      $region62: #{tpu_custom_call.1} parent=5 // pred_check_branch
        %1289 = sbr.rel (%p1287) target = $region64
      $region63: #{tpu_custom_call.1} parent=5 // pred_region
        %s1290 = ssub.s32 %s18, 2
        // Predicated region
        $region65: #{tpu_custom_call.1} parent=63 // pred_check
          %p1291 = pneg %p227
        $region66: #{tpu_custom_call.1} parent=63 // pred_check_branch
          %1293 = sbr.rel (%p1291) target = $region68
        $region67: #{tpu_custom_call.1} parent=63 // pred_region
          %s1294 = sand.u32 %s212, 1
          %s1295 = scalar_lea.sflag [#allocation4], %s1294
          %s1296 = sand.u32 %s212, 1
          %s1297 = smul.addr %s1296, 8
          %s1298 = scalar_lea.vmem [#allocation7], %s1297
          %1299 = dma.done %s1295, 128
        $region68: #{tpu_custom_call.1} parent=63 // pred_fallthru
          _
      $region64: #{tpu_custom_call.1} parent=5 // pred_fallthru
        _
    $region6: #{tpu_custom_call.1} parent=1 // loop_footer
      %s22 = sadd.s32 1, %s18
    $region7: #{tpu_custom_call.1} parent=1 // loop_footer_branch
      %17 = sbr.rel target = $region3
    $region8: #{tpu_custom_call.1} parent=1 // loop_exit
      _
    %1300 = vsyncpa [#allocation3], 1
    %s1301 = scalar_lea.sflag [#allocation3], 1
    %1302 = vsyncpa %s1301, 1
    %1303 = vsyncpa [#allocation6], 1
    %1304 = vsyncpa [#allocation4], 1
    %s1305 = scalar_lea.sflag [#allocation4], 1
    %1306 = vsyncpa %s1305, 1

</llo_original>
